<compile_context>
chip_gen: v6e
topology: v6e:2x2x1
jax: 0.10.0
libtpu: 0.0.40
codegen_flags: <defaults>
</compile_context>

<pallas_src>
import jax
import jax.numpy as jnp
from jax.experimental import pallas as pl
from jax.experimental.pallas import tpu as pltpu


LANE = 128  # fc3 outputs padded to one full lane tile


def rnn_block_kernel(x_ref, h0_ref, w1_ref, w23_ref, b12_ref, b3_ref,
                     out_ref, state_ref):
    t_blk, batch, _ = out_ref.shape
    ndims = state_ref.shape[1]

    # Initialize the VMEM-resident state carry from h0 on the first block.
    @pl.when(pl.program_id(0) == 0)
    def _():
        state_ref[...] = h0_ref[...]

    # --- Non-recurrent fc1 pre-pass: one big MXU matmul for the whole block.
    # x block is [T_blk*B, 512] bf16; bias (b1 + b2) folded in once.
    a_all = (jnp.dot(x_ref[...], w1_ref[...],
                     preferred_element_type=jnp.float32) + b12_ref[...])

    # Hoisted (outside the unrolled loop): weight load + bias broadcast.
    w23 = w23_ref[...]                                   # [ndims, ndims+LANE] bf16
    b3 = jnp.broadcast_to(b3_ref[...], (batch, LANE))    # f32

    # --- Serial recurrence over T_blk steps (fully unrolled).
    h = state_ref[...]                                   # f32 [B, ndims]
    for t in range(t_blk):
        # Fused fc2 | fc3: first ndims lanes = W2^T contribution for h_t,
        # last LANE lanes = fc3(h_{t-1}) = out_{t-1} (shifted by one step).
        z = jnp.dot(h.astype(jnp.bfloat16), w23,
                    preferred_element_type=jnp.float32)  # [B, ndims+LANE]
        h = jnp.maximum(z[:, :ndims] + a_all[t * batch:(t + 1) * batch, :], 0.0)
        if t >= 1:
            out_ref[t - 1] = (z[:, ndims:] + b3).astype(out_ref.dtype)

    # Epilogue: out for the block's last step (its fused read-out would only
    # appear in the *next* block's first fused matmul).
    z_last = jnp.dot(h.astype(jnp.bfloat16), w23[:, ndims:],
                     preferred_element_type=jnp.float32)
    out_ref[t_blk - 1] = (z_last + b3).astype(out_ref.dtype)

    state_ref[...] = h


def _pick_t_blk(T, t_blk):
    """Largest divisor of T that is <= requested t_blk (>= 1)."""
    t_blk = max(1, min(t_blk, T))
    while T % t_blk != 0:
        t_blk -= 1
    return t_blk


def rnn_single_seq(xs, h0, w1t, w23, b12, b3p, *, t_blk=8):
    """Run T RNN steps inside one pallas_call.

    xs:  [T, B, 512] f32      h0:  [B, ndims] f32
    w1t: [512, ndims] bf16    w23: [ndims, ndims+128] bf16 ([W2^T | W3^T pad])
    b12: [1, ndims] f32 (b1+b2)   b3p: [1, 128] f32 (b3 lane-padded)
    Returns (outputs [T, B, 2] f32, final_state [B, ndims] f32).
    """
    T, B, K1 = xs.shape
    ndims = h0.shape[1]
    t_blk = _pick_t_blk(T, t_blk)
    n_blocks = T // t_blk

    # bf16 streaming input, flattened to [T*B, 512] so the fc1 pre-pass is a
    # single 2-D block matmul per grid step (no in-kernel reshape).
    xs2d = xs.reshape(T * B, K1).astype(jnp.bfloat16)

    flops = (2 * T * B * K1 * ndims                      # fc1 pre-pass
             + 2 * T * B * ndims * (ndims + LANE)        # fused fc2|fc3 per step
             + 2 * n_blocks * B * ndims * LANE)          # per-block epilogue
    bytes_accessed = (xs2d.size * 2 + w1t.size * 2 + w23.size * 2
                      + (b12.size + b3p.size) * 4
                      + h0.size * 4 + T * B * LANE * 4 + B * ndims * 4)

    out_pad, state = pl.pallas_call(
        rnn_block_kernel,
        out_shape=(
            jax.ShapeDtypeStruct((T, B, LANE), jnp.float32),
            jax.ShapeDtypeStruct((B, ndims), jnp.float32),
        ),
        grid=(n_blocks,),
        in_specs=[
            pl.BlockSpec((t_blk * B, K1), lambda i: (i, 0)),        # x block (streamed)
            pl.BlockSpec((B, ndims), lambda i: (0, 0)),             # h0 (resident)
            pl.BlockSpec((K1, ndims), lambda i: (0, 0)),            # W1^T (resident)
            pl.BlockSpec((ndims, ndims + LANE), lambda i: (0, 0)),  # [W2^T|W3^T] (resident)
            pl.BlockSpec((1, ndims), lambda i: (0, 0)),             # b1+b2 (resident)
            pl.BlockSpec((1, LANE), lambda i: (0, 0)),              # b3 padded (resident)
        ],
        out_specs=(
            pl.BlockSpec((t_blk, B, LANE), lambda i: (i, 0, 0)),    # per-block logits
            pl.BlockSpec((B, ndims), lambda i: (0, 0)),             # state carry (resident)
        ),
        compiler_params=pltpu.CompilerParams(
            dimension_semantics=("arbitrary",)),
        cost_estimate=pl.CostEstimate(
            flops=flops, transcendentals=0, bytes_accessed=bytes_accessed),
    )(xs2d, h0, w1t, w23, b12, b3p)

    # Lane-dense padded output; callers needing long sequences can consume
    # out_pad lazily instead of materializing this slice.
    return out_pad[:, :, :2], state


def rnn_single_forward(x, h, params):
    """Single-step API matching rnn_single.forward(input, state)."""
    w1t, w23, b12, b3p = params
    out, state = rnn_single_seq(x[None], h, w1t, w23, b12, b3p, t_blk=1)
    return out[0], state


def init_params(key, ndims):
    """Deterministic init mimicking nn.Linear ([out, in] weights, [out] biases)."""
    ks = jax.random.split(key, 6)

    def linear(kw, kb, fan_in, fan_out):
        bound = 1.0 / jnp.sqrt(fan_in)
        w = jax.random.uniform(kw, (fan_out, fan_in), jnp.float32, -bound, bound)
        b = jax.random.uniform(kb, (fan_out,), jnp.float32, -bound, bound)
        return w, b

    fc1 = linear(ks[0], ks[1], 512, ndims)     # [ndims, 512], [ndims]
    fc2 = linear(ks[2], ks[3], ndims, ndims)   # [ndims, ndims], [ndims]
    fc3 = linear(ks[4], ks[5], ndims, 2)       # [2, ndims], [2]
    return fc1, fc2, fc3


def prepare_params(fc1, fc2, fc3, ndims):
    """Pack weights for the kernel: bf16 weights, f32 biases.

    w1t = W1^T;  w23 = [W2^T | W3^T lane-padded to 128];  b12 = b1 + b2.
    """
    (w1, b1), (w2, b2), (w3, b3) = fc1, fc2, fc3
    w1t = w1.T.astype(jnp.bfloat16)                                   # [512, ndims]
    w3p = jnp.zeros((ndims, LANE), jnp.float32).at[:, :2].set(w3.T)   # lane-padded
    w23 = jnp.concatenate([w2.T, w3p], axis=1).astype(jnp.bfloat16)   # [ndims, ndims+128]
    b12 = (b1 + b2).reshape(1, ndims).astype(jnp.float32)
    b3p = jnp.zeros((1, LANE), jnp.float32).at[:, :2].set(b3.reshape(1, 2))
    return w1t, w23, b12, b3p


if __name__ == "__main__":
    B, NDIMS, T, T_BLK = 8, 128, 16, 8

    key = jax.random.PRNGKey(0)
    k_x, k_h, k_p = jax.random.split(key, 3)

    xs = jax.random.normal(k_x, (T, B, 512), jnp.float32)
    h0 = jax.random.normal(k_h, (B, NDIMS), jnp.float32)

    fc1, fc2, fc3 = init_params(k_p, NDIMS)
    params = prepare_params(fc1, fc2, fc3, NDIMS)
    w1t, w23, b12, b3p = params

    outs, final_state = rnn_single_seq(xs, h0, *params, t_blk=T_BLK)
    jax.block_until_ready((outs, final_state))

    # ---- reference (a): same bf16 operand precision as the kernel ---------
    def step_bf16(x, h):
        a = jnp.dot(x.astype(jnp.bfloat16), w1t,
                    preferred_element_type=jnp.float32) + b12
        z = jnp.dot(h.astype(jnp.bfloat16), w23,
                    preferred_element_type=jnp.float32)
        h_new = jnp.maximum(z[:, :NDIMS] + a, 0.0)
        o = jnp.dot(h_new.astype(jnp.bfloat16), w23[:, NDIMS:],
                    preferred_element_type=jnp.float32) + b3p
        return o[:, :2], h_new

    # ---- reference (b): exact f32 PyTorch semantics ------------------------
    (w1, b1), (w2, b2), (w3, b3) = fc1, fc2, fc3

    def step_f32(x, h):
        st = jnp.maximum(x @ w1.T + b1 + h @ w2.T + b2, 0.0)
        return st @ w3.T + b3, st

    h_a, h_b = h0, h0
    outs_a, outs_b = [], []
    for t in range(T):
        o_a, h_a = step_bf16(xs[t], h_a)
        o_b, h_b = step_f32(xs[t], h_b)
        outs_a.append(o_a)
        outs_b.append(o_b)
    outs_a = jnp.stack(outs_a)
    outs_b = jnp.stack(outs_b)

    # Tight check against the bf16-precision reference: validates the shifted
    # fused fc2|fc3 output alignment, the per-block epilogue, and the state
    # carry across grid blocks.
    assert jnp.allclose(outs, outs_a, atol=2e-3, rtol=2e-3), "bf16 ref mismatch"
    assert jnp.allclose(final_state, h_a, atol=2e-3, rtol=2e-3), "bf16 state mismatch"

    # Full-f32 PyTorch semantics: bf16 operand rounding compounds with T, so
    # require only that the kernel is no further from f32 than the bf16
    # reference is (plus slack).
    err_out_kernel = float(jnp.max(jnp.abs(outs - outs_b)))
    err_out_bf16 = float(jnp.max(jnp.abs(outs_a - outs_b)))
    assert err_out_kernel <= err_out_bf16 + 1e-2, "f32 ref divergence"
    err_st_kernel = float(jnp.max(jnp.abs(final_state - h_b)))
    err_st_bf16 = float(jnp.max(jnp.abs(h_a - h_b)))
    assert err_st_kernel <= err_st_bf16 + 1e-2, "f32 state divergence"

    # Single-step API (exactly the PyTorch module's forward for one step).
    o1, s1 = rnn_single_forward(xs[0], h0, params)
    jax.block_until_ready((o1, s1))
    assert jnp.allclose(o1, outs[0], atol=1e-3, rtol=1e-3)
    assert jnp.allclose(s1, step_bf16(xs[0], h0)[1], atol=2e-3, rtol=2e-3)

    print("KERNEL_OK")
</pallas_src>

<mosaic_0001>
module attributes {stable_mosaic.version = 11 : i64} {
  func.func @rnn_block_kernel(%arg0: i32, %arg1: memref<64x512xbf16, #tpu.memory_space<vmem>>, %arg2: memref<8x128xf32, #tpu.memory_space<vmem>>, %arg3: memref<512x128xbf16, #tpu.memory_space<vmem>>, %arg4: memref<128x256xbf16, #tpu.memory_space<vmem>>, %arg5: memref<1x128xf32, #tpu.memory_space<vmem>>, %arg6: memref<1x128xf32, #tpu.memory_space<vmem>>, %arg7: memref<8x8x128xf32, #tpu.memory_space<vmem>>, %arg8: memref<8x128xf32, #tpu.memory_space<vmem>>) attributes {dimension_semantics = [#tpu.dimension_semantics<arbitrary>], iteration_bounds = array<i64: 2>, scalar_prefetch = 0 : i64, scratch_operands = 0 : i64, tpu.core_type = #tpu.core_type<tc>, window_params = [{transform_indices = @transform_0, window_bounds = array<i64: 64, 512>}, {pipeline_mode = #tpu.pipeline_mode<synchronous>, transform_indices = @transform_1, window_bounds = array<i64: 8, 128>}, {pipeline_mode = #tpu.pipeline_mode<synchronous>, transform_indices = @transform_2, window_bounds = array<i64: 512, 128>}, {pipeline_mode = #tpu.pipeline_mode<synchronous>, transform_indices = @transform_3, window_bounds = array<i64: 128, 256>}, {pipeline_mode = #tpu.pipeline_mode<synchronous>, transform_indices = @transform_4, window_bounds = array<i64: 1, 128>}, {pipeline_mode = #tpu.pipeline_mode<synchronous>, transform_indices = @transform_5, window_bounds = array<i64: 1, 128>}, {transform_indices = @transform_6, window_bounds = array<i64: 8, 8, 128>}, {pipeline_mode = #tpu.pipeline_mode<synchronous>, transform_indices = @transform_7, window_bounds = array<i64: 8, 128>}]} {
    %c0_i32 = arith.constant 0 : i32
    %0 = arith.cmpi eq, %arg0, %c0_i32 : i32
    %1 = arith.extui %0 : i1 to i32
    %c0_i32_0 = arith.constant 0 : i32
    %2 = arith.cmpi ne, %1, %c0_i32_0 : i32
    scf.if %2 {
      %c0_48 = arith.constant 0 : index
      %c0_49 = arith.constant 0 : index
      %113 = vector.load %arg2[%c0_48, %c0_49] : memref<8x128xf32, #tpu.memory_space<vmem>>, vector<8x128xf32>
      %c0_50 = arith.constant 0 : index
      %c0_51 = arith.constant 0 : index
      %114 = vector.load %arg8[%c0_50, %c0_51] : memref<8x128xf32, #tpu.memory_space<vmem>>, vector<8x128xf32>
      tpu.vector_store %arg8[%c0_50, %c0_51], %113 {strides = array<i32>} : memref<8x128xf32, #tpu.memory_space<vmem>>, vector<8x128xf32>,
    } else {
    }
    %c0 = arith.constant 0 : index
    %c0_1 = arith.constant 0 : index
    %3 = vector.load %arg1[%c0, %c0_1] : memref<64x512xbf16, #tpu.memory_space<vmem>>, vector<64x512xbf16>
    %c0_2 = arith.constant 0 : index
    %c0_3 = arith.constant 0 : index
    %4 = vector.load %arg3[%c0_2, %c0_3] : memref<512x128xbf16, #tpu.memory_space<vmem>>, vector<512x128xbf16>
    %cst = arith.constant dense<0.000000e+00> : vector<64x128xf32>
    %5 = tpu.matmul %3, %4, %cst {dimension_numbers = #tpu.dot_dimension_numbers<[1], [0], [0], [1], [0, 0, 1, 1], [], []>} : vector<64x512xbf16>, vector<512x128xbf16>, vector<64x128xf32> -> vector<64x128xf32>
    %c0_4 = arith.constant 0 : index
    %c0_5 = arith.constant 0 : index
    %6 = vector.load %arg5[%c0_4, %c0_5] : memref<1x128xf32, #tpu.memory_space<vmem>>, vector<1x128xf32>
    %7 = vector.broadcast %6 : vector<1x128xf32> to vector<64x128xf32>
    %8 = arith.addf %5, %7 : vector<64x128xf32>
    %c0_6 = arith.constant 0 : index
    %c0_7 = arith.constant 0 : index
    %9 = vector.load %arg4[%c0_6, %c0_7] : memref<128x256xbf16, #tpu.memory_space<vmem>>, vector<128x256xbf16>
    %c0_8 = arith.constant 0 : index
    %c0_9 = arith.constant 0 : index
    %10 = vector.load %arg6[%c0_8, %c0_9] : memref<1x128xf32, #tpu.memory_space<vmem>>, vector<1x128xf32>
    %11 = vector.shape_cast %10 : vector<1x128xf32> to vector<1x128xf32>
    %12 = vector.broadcast %11 : vector<1x128xf32> to vector<8x128xf32>
    %c0_10 = arith.constant 0 : index
    %c0_11 = arith.constant 0 : index
    %13 = vector.load %arg8[%c0_10, %c0_11] : memref<8x128xf32, #tpu.memory_space<vmem>>, vector<8x128xf32>
    %14 = arith.truncf %13 : vector<8x128xf32> to vector<8x128xbf16>
    %cst_12 = arith.constant dense<0.000000e+00> : vector<8x256xf32>
    %15 = tpu.matmul %14, %9, %cst_12 {dimension_numbers = #tpu.dot_dimension_numbers<[1], [0], [0], [1], [0, 0, 1, 1], [], []>} : vector<8x128xbf16>, vector<128x256xbf16>, vector<8x256xf32> -> vector<8x256xf32>
    %16 = vector.extract_strided_slice %15 {offsets = [0, 0], sizes = [8, 128], strides = [1, 1]} : vector<8x256xf32> to vector<8x128xf32>
    %17 = vector.extract_strided_slice %8 {offsets = [0, 0], sizes = [8, 128], strides = [1, 1]} : vector<64x128xf32> to vector<8x128xf32>
    %18 = arith.addf %16, %17 : vector<8x128xf32>
    %cst_13 = arith.constant 0.000000e+00 : f32
    %19 = vector.broadcast %cst_13 : f32 to vector<8x128xf32>
    %20 = arith.maximumf %18, %19 : vector<8x128xf32>
    %21 = arith.truncf %20 : vector<8x128xf32> to vector<8x128xbf16>
    %cst_14 = arith.constant dense<0.000000e+00> : vector<8x256xf32>
    %22 = tpu.matmul %21, %9, %cst_14 {dimension_numbers = #tpu.dot_dimension_numbers<[1], [0], [0], [1], [0, 0, 1, 1], [], []>} : vector<8x128xbf16>, vector<128x256xbf16>, vector<8x256xf32> -> vector<8x256xf32>
    %23 = vector.extract_strided_slice %22 {offsets = [0, 0], sizes = [8, 128], strides = [1, 1]} : vector<8x256xf32> to vector<8x128xf32>
    %24 = vector.extract_strided_slice %8 {offsets = [8, 0], sizes = [8, 128], strides = [1, 1]} : vector<64x128xf32> to vector<8x128xf32>
    %25 = arith.addf %23, %24 : vector<8x128xf32>
    %cst_15 = arith.constant 0.000000e+00 : f32
    %26 = vector.broadcast %cst_15 : f32 to vector<8x128xf32>
    %27 = arith.maximumf %25, %26 : vector<8x128xf32>
    %28 = vector.extract_strided_slice %22 {offsets = [0, 128], sizes = [8, 128], strides = [1, 1]} : vector<8x256xf32> to vector<8x128xf32>
    %29 = arith.addf %28, %12 : vector<8x128xf32>
    %c0_16 = arith.constant 0 : index
    %c0_17 = arith.constant 0 : index
    %c0_18 = arith.constant 0 : index
    %30 = vector.load %arg7[%c0_16, %c0_17, %c0_18] : memref<8x8x128xf32, #tpu.memory_space<vmem>>, vector<1x8x128xf32>
    %31 = vector.shape_cast %30 : vector<1x8x128xf32> to vector<8x128xf32>
    %32 = vector.shape_cast %29 : vector<8x128xf32> to vector<1x8x128xf32>
    tpu.vector_store %arg7[%c0_16, %c0_17, %c0_18], %32 {strides = array<i32>} : memref<8x8x128xf32, #tpu.memory_space<vmem>>, vector<1x8x128xf32>,
    %33 = arith.truncf %27 : vector<8x128xf32> to vector<8x128xbf16>
    %cst_19 = arith.constant dense<0.000000e+00> : vector<8x256xf32>
    %34 = tpu.matmul %33, %9, %cst_19 {dimension_numbers = #tpu.dot_dimension_numbers<[1], [0], [0], [1], [0, 0, 1, 1], [], []>} : vector<8x128xbf16>, vector<128x256xbf16>, vector<8x256xf32> -> vector<8x256xf32>
    %35 = vector.extract_strided_slice %34 {offsets = [0, 0], sizes = [8, 128], strides = [1, 1]} : vector<8x256xf32> to vector<8x128xf32>
    %36 = vector.extract_strided_slice %8 {offsets = [16, 0], sizes = [8, 128], strides = [1, 1]} : vector<64x128xf32> to vector<8x128xf32>
    %37 = arith.addf %35, %36 : vector<8x128xf32>
    %cst_20 = arith.constant 0.000000e+00 : f32
    %38 = vector.broadcast %cst_20 : f32 to vector<8x128xf32>
    %39 = arith.maximumf %37, %38 : vector<8x128xf32>
    %40 = vector.extract_strided_slice %34 {offsets = [0, 128], sizes = [8, 128], strides = [1, 1]} : vector<8x256xf32> to vector<8x128xf32>
    %41 = arith.addf %40, %12 : vector<8x128xf32>
    %c1 = arith.constant 1 : index
    %c0_21 = arith.constant 0 : index
    %c0_22 = arith.constant 0 : index
    %42 = vector.load %arg7[%c1, %c0_21, %c0_22] : memref<8x8x128xf32, #tpu.memory_space<vmem>>, vector<1x8x128xf32>
    %43 = vector.shape_cast %42 : vector<1x8x128xf32> to vector<8x128xf32>
    %44 = vector.shape_cast %41 : vector<8x128xf32> to vector<1x8x128xf32>
    tpu.vector_store %arg7[%c1, %c0_21, %c0_22], %44 {strides = array<i32>} : memref<8x8x128xf32, #tpu.memory_space<vmem>>, vector<1x8x128xf32>,
    %45 = arith.truncf %39 : vector<8x128xf32> to vector<8x128xbf16>
    %cst_23 = arith.constant dense<0.000000e+00> : vector<8x256xf32>
    %46 = tpu.matmul %45, %9, %cst_23 {dimension_numbers = #tpu.dot_dimension_numbers<[1], [0], [0], [1], [0, 0, 1, 1], [], []>} : vector<8x128xbf16>, vector<128x256xbf16>, vector<8x256xf32> -> vector<8x256xf32>
    %47 = vector.extract_strided_slice %46 {offsets = [0, 0], sizes = [8, 128], strides = [1, 1]} : vector<8x256xf32> to vector<8x128xf32>
    %48 = vector.extract_strided_slice %8 {offsets = [24, 0], sizes = [8, 128], strides = [1, 1]} : vector<64x128xf32> to vector<8x128xf32>
    %49 = arith.addf %47, %48 : vector<8x128xf32>
    %cst_24 = arith.constant 0.000000e+00 : f32
    %50 = vector.broadcast %cst_24 : f32 to vector<8x128xf32>
    %51 = arith.maximumf %49, %50 : vector<8x128xf32>
    %52 = vector.extract_strided_slice %46 {offsets = [0, 128], sizes = [8, 128], strides = [1, 1]} : vector<8x256xf32> to vector<8x128xf32>
    %53 = arith.addf %52, %12 : vector<8x128xf32>
    %c2 = arith.constant 2 : index
    %c0_25 = arith.constant 0 : index
    %c0_26 = arith.constant 0 : index
    %54 = vector.load %arg7[%c2, %c0_25, %c0_26] : memref<8x8x128xf32, #tpu.memory_space<vmem>>, vector<1x8x128xf32>
    %55 = vector.shape_cast %54 : vector<1x8x128xf32> to vector<8x128xf32>
    %56 = vector.shape_cast %53 : vector<8x128xf32> to vector<1x8x128xf32>
    tpu.vector_store %arg7[%c2, %c0_25, %c0_26], %56 {strides = array<i32>} : memref<8x8x128xf32, #tpu.memory_space<vmem>>, vector<1x8x128xf32>,
    %57 = arith.truncf %51 : vector<8x128xf32> to vector<8x128xbf16>
    %cst_27 = arith.constant dense<0.000000e+00> : vector<8x256xf32>
    %58 = tpu.matmul %57, %9, %cst_27 {dimension_numbers = #tpu.dot_dimension_numbers<[1], [0], [0], [1], [0, 0, 1, 1], [], []>} : vector<8x128xbf16>, vector<128x256xbf16>, vector<8x256xf32> -> vector<8x256xf32>
    %59 = vector.extract_strided_slice %58 {offsets = [0, 0], sizes = [8, 128], strides = [1, 1]} : vector<8x256xf32> to vector<8x128xf32>
    %60 = vector.extract_strided_slice %8 {offsets = [32, 0], sizes = [8, 128], strides = [1, 1]} : vector<64x128xf32> to vector<8x128xf32>
    %61 = arith.addf %59, %60 : vector<8x128xf32>
    %cst_28 = arith.constant 0.000000e+00 : f32
    %62 = vector.broadcast %cst_28 : f32 to vector<8x128xf32>
    %63 = arith.maximumf %61, %62 : vector<8x128xf32>
    %64 = vector.extract_strided_slice %58 {offsets = [0, 128], sizes = [8, 128], strides = [1, 1]} : vector<8x256xf32> to vector<8x128xf32>
    %65 = arith.addf %64, %12 : vector<8x128xf32>
    %c3 = arith.constant 3 : index
    %c0_29 = arith.constant 0 : index
    %c0_30 = arith.constant 0 : index
    %66 = vector.load %arg7[%c3, %c0_29, %c0_30] : memref<8x8x128xf32, #tpu.memory_space<vmem>>, vector<1x8x128xf32>
    %67 = vector.shape_cast %66 : vector<1x8x128xf32> to vector<8x128xf32>
    %68 = vector.shape_cast %65 : vector<8x128xf32> to vector<1x8x128xf32>
    tpu.vector_store %arg7[%c3, %c0_29, %c0_30], %68 {strides = array<i32>} : memref<8x8x128xf32, #tpu.memory_space<vmem>>, vector<1x8x128xf32>,
    %69 = arith.truncf %63 : vector<8x128xf32> to vector<8x128xbf16>
    %cst_31 = arith.constant dense<0.000000e+00> : vector<8x256xf32>
    %70 = tpu.matmul %69, %9, %cst_31 {dimension_numbers = #tpu.dot_dimension_numbers<[1], [0], [0], [1], [0, 0, 1, 1], [], []>} : vector<8x128xbf16>, vector<128x256xbf16>, vector<8x256xf32> -> vector<8x256xf32>
    %71 = vector.extract_strided_slice %70 {offsets = [0, 0], sizes = [8, 128], strides = [1, 1]} : vector<8x256xf32> to vector<8x128xf32>
    %72 = vector.extract_strided_slice %8 {offsets = [40, 0], sizes = [8, 128], strides = [1, 1]} : vector<64x128xf32> to vector<8x128xf32>
    %73 = arith.addf %71, %72 : vector<8x128xf32>
    %cst_32 = arith.constant 0.000000e+00 : f32
    %74 = vector.broadcast %cst_32 : f32 to vector<8x128xf32>
    %75 = arith.maximumf %73, %74 : vector<8x128xf32>
    %76 = vector.extract_strided_slice %70 {offsets = [0, 128], sizes = [8, 128], strides = [1, 1]} : vector<8x256xf32> to vector<8x128xf32>
    %77 = arith.addf %76, %12 : vector<8x128xf32>
    %c4 = arith.constant 4 : index
    %c0_33 = arith.constant 0 : index
    %c0_34 = arith.constant 0 : index
    %78 = vector.load %arg7[%c4, %c0_33, %c0_34] : memref<8x8x128xf32, #tpu.memory_space<vmem>>, vector<1x8x128xf32>
    %79 = vector.shape_cast %78 : vector<1x8x128xf32> to vector<8x128xf32>
    %80 = vector.shape_cast %77 : vector<8x128xf32> to vector<1x8x128xf32>
    tpu.vector_store %arg7[%c4, %c0_33, %c0_34], %80 {strides = array<i32>} : memref<8x8x128xf32, #tpu.memory_space<vmem>>, vector<1x8x128xf32>,
    %81 = arith.truncf %75 : vector<8x128xf32> to vector<8x128xbf16>
    %cst_35 = arith.constant dense<0.000000e+00> : vector<8x256xf32>
    %82 = tpu.matmul %81, %9, %cst_35 {dimension_numbers = #tpu.dot_dimension_numbers<[1], [0], [0], [1], [0, 0, 1, 1], [], []>} : vector<8x128xbf16>, vector<128x256xbf16>, vector<8x256xf32> -> vector<8x256xf32>
    %83 = vector.extract_strided_slice %82 {offsets = [0, 0], sizes = [8, 128], strides = [1, 1]} : vector<8x256xf32> to vector<8x128xf32>
    %84 = vector.extract_strided_slice %8 {offsets = [48, 0], sizes = [8, 128], strides = [1, 1]} : vector<64x128xf32> to vector<8x128xf32>
    %85 = arith.addf %83, %84 : vector<8x128xf32>
    %cst_36 = arith.constant 0.000000e+00 : f32
    %86 = vector.broadcast %cst_36 : f32 to vector<8x128xf32>
    %87 = arith.maximumf %85, %86 : vector<8x128xf32>
    %88 = vector.extract_strided_slice %82 {offsets = [0, 128], sizes = [8, 128], strides = [1, 1]} : vector<8x256xf32> to vector<8x128xf32>
    %89 = arith.addf %88, %12 : vector<8x128xf32>
    %c5 = arith.constant 5 : index
    %c0_37 = arith.constant 0 : index
    %c0_38 = arith.constant 0 : index
    %90 = vector.load %arg7[%c5, %c0_37, %c0_38] : memref<8x8x128xf32, #tpu.memory_space<vmem>>, vector<1x8x128xf32>
    %91 = vector.shape_cast %90 : vector<1x8x128xf32> to vector<8x128xf32>
    %92 = vector.shape_cast %89 : vector<8x128xf32> to vector<1x8x128xf32>
    tpu.vector_store %arg7[%c5, %c0_37, %c0_38], %92 {strides = array<i32>} : memref<8x8x128xf32, #tpu.memory_space<vmem>>, vector<1x8x128xf32>,
    %93 = arith.truncf %87 : vector<8x128xf32> to vector<8x128xbf16>
    %cst_39 = arith.constant dense<0.000000e+00> : vector<8x256xf32>
    %94 = tpu.matmul %93, %9, %cst_39 {dimension_numbers = #tpu.dot_dimension_numbers<[1], [0], [0], [1], [0, 0, 1, 1], [], []>} : vector<8x128xbf16>, vector<128x256xbf16>, vector<8x256xf32> -> vector<8x256xf32>
    %95 = vector.extract_strided_slice %94 {offsets = [0, 0], sizes = [8, 128], strides = [1, 1]} : vector<8x256xf32> to vector<8x128xf32>
    %96 = vector.extract_strided_slice %8 {offsets = [56, 0], sizes = [8, 128], strides = [1, 1]} : vector<64x128xf32> to vector<8x128xf32>
    %97 = arith.addf %95, %96 : vector<8x128xf32>
    %cst_40 = arith.constant 0.000000e+00 : f32
    %98 = vector.broadcast %cst_40 : f32 to vector<8x128xf32>
    %99 = arith.maximumf %97, %98 : vector<8x128xf32>
    %100 = vector.extract_strided_slice %94 {offsets = [0, 128], sizes = [8, 128], strides = [1, 1]} : vector<8x256xf32> to vector<8x128xf32>
    %101 = arith.addf %100, %12 : vector<8x128xf32>
    %c6 = arith.constant 6 : index
    %c0_41 = arith.constant 0 : index
    %c0_42 = arith.constant 0 : index
    %102 = vector.load %arg7[%c6, %c0_41, %c0_42] : memref<8x8x128xf32, #tpu.memory_space<vmem>>, vector<1x8x128xf32>
    %103 = vector.shape_cast %102 : vector<1x8x128xf32> to vector<8x128xf32>
    %104 = vector.shape_cast %101 : vector<8x128xf32> to vector<1x8x128xf32>
    tpu.vector_store %arg7[%c6, %c0_41, %c0_42], %104 {strides = array<i32>} : memref<8x8x128xf32, #tpu.memory_space<vmem>>, vector<1x8x128xf32>,
    %105 = arith.truncf %99 : vector<8x128xf32> to vector<8x128xbf16>
    %106 = vector.extract_strided_slice %9 {offsets = [0, 128], sizes = [128, 128], strides = [1, 1]} : vector<128x256xbf16> to vector<128x128xbf16>
    %cst_43 = arith.constant dense<0.000000e+00> : vector<8x128xf32>
    %107 = tpu.matmul %105, %106, %cst_43 {dimension_numbers = #tpu.dot_dimension_numbers<[1], [0], [0], [1], [0, 0, 1, 1], [], []>} : vector<8x128xbf16>, vector<128x128xbf16>, vector<8x128xf32> -> vector<8x128xf32>
    %108 = arith.addf %107, %12 : vector<8x128xf32>
    %c7 = arith.constant 7 : index
    %c0_44 = arith.constant 0 : index
    %c0_45 = arith.constant 0 : index
    %109 = vector.load %arg7[%c7, %c0_44, %c0_45] : memref<8x8x128xf32, #tpu.memory_space<vmem>>, vector<1x8x128xf32>
    %110 = vector.shape_cast %109 : vector<1x8x128xf32> to vector<8x128xf32>
    %111 = vector.shape_cast %108 : vector<8x128xf32> to vector<1x8x128xf32>
    tpu.vector_store %arg7[%c7, %c0_44, %c0_45], %111 {strides = array<i32>} : memref<8x8x128xf32, #tpu.memory_space<vmem>>, vector<1x8x128xf32>,
    %c0_46 = arith.constant 0 : index
    %c0_47 = arith.constant 0 : index
    %112 = vector.load %arg8[%c0_46, %c0_47] : memref<8x128xf32, #tpu.memory_space<vmem>>, vector<8x128xf32>
    tpu.vector_store %arg8[%c0_46, %c0_47], %99 {strides = array<i32>} : memref<8x128xf32, #tpu.memory_space<vmem>>, vector<8x128xf32>,
    return
  }
  func.func @transform_0(%arg0: i32) -> (i32, i32) {
    %c0_i32 = arith.constant 0 : i32
    %c0_i32_0 = arith.constant 0 : i32
    return %arg0, %c0_i32 : i32, i32
  }
  func.func @transform_1(%arg0: i32) -> (i32, i32) {
    %c0_i32 = arith.constant 0 : i32
    %c0_i32_0 = arith.constant 0 : i32
    %c0_i32_1 = arith.constant 0 : i32
    return %c0_i32, %c0_i32_0 : i32, i32
  }
  func.func @transform_2(%arg0: i32) -> (i32, i32) {
    %c0_i32 = arith.constant 0 : i32
    %c0_i32_0 = arith.constant 0 : i32
    %c0_i32_1 = arith.constant 0 : i32
    return %c0_i32, %c0_i32_0 : i32, i32
  }
  func.func @transform_3(%arg0: i32) -> (i32, i32) {
    %c0_i32 = arith.constant 0 : i32
    %c0_i32_0 = arith.constant 0 : i32
    %c0_i32_1 = arith.constant 0 : i32
    return %c0_i32, %c0_i32_0 : i32, i32
  }
  func.func @transform_4(%arg0: i32) -> (i32, i32) {
    %c0_i32 = arith.constant 0 : i32
    %c0_i32_0 = arith.constant 0 : i32
    %c0_i32_1 = arith.constant 0 : i32
    return %c0_i32, %c0_i32_0 : i32, i32
  }
  func.func @transform_5(%arg0: i32) -> (i32, i32) {
    %c0_i32 = arith.constant 0 : i32
    %c0_i32_0 = arith.constant 0 : i32
    %c0_i32_1 = arith.constant 0 : i32
    return %c0_i32, %c0_i32_0 : i32, i32
  }
  func.func @transform_6(%arg0: i32) -> (i32, i32, i32) {
    %c0_i32 = arith.constant 0 : i32
    %c0_i32_0 = arith.constant 0 : i32
    %c0_i32_1 = arith.constant 0 : i32
    return %arg0, %c0_i32, %c0_i32_0 : i32, i32, i32
  }
  func.func @transform_7(%arg0: i32) -> (i32, i32) {
    %c0_i32 = arith.constant 0 : i32
    %c0_i32_0 = arith.constant 0 : i32
    %c0_i32_1 = arith.constant 0 : i32
    return %c0_i32, %c0_i32_0 : i32, i32
  }
}

</mosaic_0001>

<llo_original>
// kernel: tpu_custom_call.1
$region0: #{tpu_custom_call.1}
  #allocation0 [shape = 'u32[]', space=smem, size = 0x4, offset = 0x4, fixed_abs, tag = 'smem constant byte address 0x4 - core index']
  #allocation1 [shape = 'u32[144,128]{1,0:T(1,128)}', space=vmem, size = 0x12000, scoped, tag = 'internal scratch']
  %s0 = inlined_call_operand.hbm [shape: bf16[128,512], index: 0, kind: input, shape index: {}]
  %s1 = inlined_call_operand.hbm [shape: f32[8,128], index: 1, kind: input, shape index: {}]
  %s2 = inlined_call_operand.hbm [shape: bf16[512,128], index: 2, kind: input, shape index: {}]
  %s3 = inlined_call_operand.hbm [shape: bf16[128,256], index: 3, kind: input, shape index: {}]
  %s4 = inlined_call_operand.vmem [shape: f32[1,128], index: 4, kind: input, shape index: {}]
  %s5 = inlined_call_operand.vmem [shape: f32[1,128], index: 5, kind: input, shape index: {}]
  %s6 = inlined_call_operand.hbm [shape: f32[16,8,128], index: 6, kind: output, shape index: {0}]
  %s7 = inlined_call_operand.hbm [shape: f32[8,128], index: 7, kind: output, shape index: {1}]
  %8 = xla_tuple %s6, %s7
  %s9 = sld [smem:[#allocation0]]
  $region85: #{tpu_custom_call.1} parent=0
    _
  %s11 = ssub.s32 1, %s9
  %s12 = scalar_select 0, %s11, %s9
  $region1: #{tpu_custom_call.1} parent=0
    #allocation2 [shape = 'u8[131072]{0}', space=vmem, size = 0x20000, scoped, tag = 'input window, operand 0']
    #allocation3 [shape = 's32[2]{0}', space=sflag, size = 0x8, scoped, tag = 'scoped memory for tpu_custom_call.1']
    #allocation4 [shape = 's32[2]{0}', space=sflag, size = 0x8, scoped, tag = 'scoped memory for tpu_custom_call.1']
    #allocation5 [shape = 'u8[4096]{0}', space=vmem, size = 0x1000, scoped, tag = 'input window, operand 1, single buffered']
    #allocation6 [shape = 's32[1]{0}', space=sflag, size = 0x4, scoped, tag = 'scoped memory for tpu_custom_call.1']
    #allocation7 [shape = 'u8[131072]{0}', space=vmem, size = 0x20000, scoped, tag = 'input window, operand 2, single buffered']
    #allocation8 [shape = 'u8[65536]{0}', space=vmem, size = 0x10000, scoped, tag = 'input window, operand 3, single buffered']
    #allocation9 [shape = 's32[1]{0}', space=sflag, size = 0x4, scoped, tag = 'scoped memory for tpu_custom_call.1']
    #allocation10 [shape = 'u8[65536]{0}', space=vmem, size = 0x10000, scoped, tag = 'output window, operand 0']
    #allocation11 [shape = 'u8[4096]{0}', space=vmem, size = 0x1000, scoped, tag = 'output window, operand 1, single buffered']
    #allocation12 [shape = 's32[1]{0}', space=sflag, size = 0x4, scoped, tag = 'scoped memory for tpu_custom_call.1']
    %13 = vsyncpa [#allocation3], 0
    %s14 = scalar_lea.sflag [#allocation3], 1
    %15 = vsyncpa %s14, 0
    %16 = vsyncpa [#allocation6], 0
    %17 = vsyncpa [#allocation9], 0
    %18 = vsyncpa [#allocation4], 0
    %s19 = scalar_lea.sflag [#allocation4], 1
    %20 = vsyncpa %s19, 0
    %21 = vsyncpa [#allocation12], 0
    loop: start=0, step=1, limit=4
    $region2: #{tpu_custom_call.1} parent=1 // loop_pre_header
      _
    $region3: #{tpu_custom_call.1} parent=1 // loop_header
      %s23 = sphi 0, %s27
      %p24 = scmp.ge.s32.totalorder %s23, 4
      %s33 = sphi 0, %s35
      %s36 = sphi 0, %s33
      %s37 = sphi 0, %s36
      %s53 = sphi 0, %s37
      %s57 = sphi 0, %s57
      %s59 = sphi 0, %s57
      %s60 = sphi 0, %s59
      %s74 = sphi 0, %s60
      %s78 = sphi 0, %s78
      %s80 = sphi 0, %s78
      %s81 = sphi 0, %s80
      %s95 = sphi 0, %s81
      %s99 = sphi 0, %s99
      %s101 = sphi 0, %s99
      %s102 = sphi 0, %s101
      %s116 = sphi 0, %s102
      %s120 = sphi 0, %s120
      %s122 = sphi 0, %s120
      %s123 = sphi 0, %s122
      %s137 = sphi 0, %s123
      %s141 = sphi 0, %s141
      %s143 = sphi 0, %s141
      %s144 = sphi 0, %s143
      %s158 = sphi 0, %s144
      %s164 = sphi 0, %s166
      %s167 = sphi 0, %s164
      %s168 = sphi 0, %s167
      %s184 = sphi 0, %s168
      %s188 = sphi 0, %s188
      %s190 = sphi 0, %s188
      %s191 = sphi 0, %s190
      %s205 = sphi 0, %s191
    $region4: #{tpu_custom_call.1} parent=1 // loop_header_branch
      %26 = sbr.rel (%p24) target = $region8
    $region5: #{tpu_custom_call.1} parent=1 // loop_body
      %s28 = ssub.s32 %s23, 1
      %s29 = ssub.s32 %s23, 2
      %s30 = sadd.s32 %s23, 1
      %s31 = ssub.s32 %s23, %s30
      %p32 = scmp.eq.s32.totalorder %s31, 0
      %s34 = sadd.s32 %s33, 1
      %s35 = scalar_select %p32, %s33, %s34
      %p38 = pneg %p32
      %p39 = scmp.eq.s32.totalorder %s23, 1
      %p40 = por %p38, %p39
      %p41 = scmp.ne.s32.totalorder %s33, %s36
      %p42 = scmp.eq.s32.totalorder %s23, 0
      %p43 = por %p41, %p42
      %p44 = scmp.ne.s32.totalorder %s33, %s36
      %p45 = scmp.eq.s32.totalorder %s28, 1
      %p46 = por %p44, %p45
      %p47 = scmp.ne.s32.totalorder %s36, %s37
      %p48 = scmp.eq.s32.totalorder %s28, 0
      %p49 = por %p47, %p48
      %p50 = scmp.ne.s32.totalorder %s36, %s37
      %p51 = scmp.eq.s32.totalorder %s29, 1
      %p52 = por %p50, %p51
      %p54 = scmp.ne.s32.totalorder %s37, %s53
      %p55 = scmp.eq.s32.totalorder %s29, 0
      %p56 = por %p54, %p55
      %s58 = sadd.s32 %s57, 1
      %p61 = scmp.eq.s32.totalorder %s23, 1
      %p62 = scmp.ne.s32.totalorder %s57, %s59
      %p63 = scmp.eq.s32.totalorder %s23, 0
      %p64 = por %p62, %p63
      %p65 = scmp.ne.s32.totalorder %s57, %s59
      %p66 = scmp.eq.s32.totalorder %s28, 1
      %p67 = por %p65, %p66
      %p68 = scmp.ne.s32.totalorder %s59, %s60
      %p69 = scmp.eq.s32.totalorder %s28, 0
      %p70 = por %p68, %p69
      %p71 = scmp.ne.s32.totalorder %s59, %s60
      %p72 = scmp.eq.s32.totalorder %s29, 1
      %p73 = por %p71, %p72
      %p75 = scmp.ne.s32.totalorder %s60, %s74
      %p76 = scmp.eq.s32.totalorder %s29, 0
      %p77 = por %p75, %p76
      %s79 = sadd.s32 %s78, 1
      %p82 = scmp.eq.s32.totalorder %s23, 1
      %p83 = scmp.ne.s32.totalorder %s78, %s80
      %p84 = scmp.eq.s32.totalorder %s23, 0
      %p85 = por %p83, %p84
      %p86 = scmp.ne.s32.totalorder %s78, %s80
      %p87 = scmp.eq.s32.totalorder %s28, 1
      %p88 = por %p86, %p87
      %p89 = scmp.ne.s32.totalorder %s80, %s81
      %p90 = scmp.eq.s32.totalorder %s28, 0
      %p91 = por %p89, %p90
      %p92 = scmp.ne.s32.totalorder %s80, %s81
      %p93 = scmp.eq.s32.totalorder %s29, 1
      %p94 = por %p92, %p93
      %p96 = scmp.ne.s32.totalorder %s81, %s95
      %p97 = scmp.eq.s32.totalorder %s29, 0
      %p98 = por %p96, %p97
      %s100 = sadd.s32 %s99, 1
      %p103 = scmp.eq.s32.totalorder %s23, 1
      %p104 = scmp.ne.s32.totalorder %s99, %s101
      %p105 = scmp.eq.s32.totalorder %s23, 0
      %p106 = por %p104, %p105
      %p107 = scmp.ne.s32.totalorder %s99, %s101
      %p108 = scmp.eq.s32.totalorder %s28, 1
      %p109 = por %p107, %p108
      %p110 = scmp.ne.s32.totalorder %s101, %s102
      %p111 = scmp.eq.s32.totalorder %s28, 0
      %p112 = por %p110, %p111
      %p113 = scmp.ne.s32.totalorder %s101, %s102
      %p114 = scmp.eq.s32.totalorder %s29, 1
      %p115 = por %p113, %p114
      %p117 = scmp.ne.s32.totalorder %s102, %s116
      %p118 = scmp.eq.s32.totalorder %s29, 0
      %p119 = por %p117, %p118
      %s121 = sadd.s32 %s120, 1
      %p124 = scmp.eq.s32.totalorder %s23, 1
      %p125 = scmp.ne.s32.totalorder %s120, %s122
      %p126 = scmp.eq.s32.totalorder %s23, 0
      %p127 = por %p125, %p126
      %p128 = scmp.ne.s32.totalorder %s120, %s122
      %p129 = scmp.eq.s32.totalorder %s28, 1
      %p130 = por %p128, %p129
      %p131 = scmp.ne.s32.totalorder %s122, %s123
      %p132 = scmp.eq.s32.totalorder %s28, 0
      %p133 = por %p131, %p132
      %p134 = scmp.ne.s32.totalorder %s122, %s123
      %p135 = scmp.eq.s32.totalorder %s29, 1
      %p136 = por %p134, %p135
      %p138 = scmp.ne.s32.totalorder %s123, %s137
      %p139 = scmp.eq.s32.totalorder %s29, 0
      %p140 = por %p138, %p139
      %s142 = sadd.s32 %s141, 1
      %p145 = scmp.eq.s32.totalorder %s23, 1
      %p146 = scmp.ne.s32.totalorder %s141, %s143
      %p147 = scmp.eq.s32.totalorder %s23, 0
      %p148 = por %p146, %p147
      %p149 = scmp.ne.s32.totalorder %s141, %s143
      %p150 = scmp.eq.s32.totalorder %s28, 1
      %p151 = por %p149, %p150
      %p152 = scmp.ne.s32.totalorder %s143, %s144
      %p153 = scmp.eq.s32.totalorder %s28, 0
      %p154 = por %p152, %p153
      %p155 = scmp.ne.s32.totalorder %s143, %s144
      %p156 = scmp.eq.s32.totalorder %s29, 1
      %p157 = por %p155, %p156
      %p159 = scmp.ne.s32.totalorder %s144, %s158
      %p160 = scmp.eq.s32.totalorder %s29, 0
      %p161 = por %p159, %p160
      %s162 = ssub.s32 %s23, %s30
      %p163 = scmp.eq.s32.totalorder %s162, 0
      %s165 = sadd.s32 %s164, 1
      %s166 = scalar_select %p163, %s164, %s165
      %p169 = pneg %p163
      %p170 = scmp.eq.s32.totalorder %s23, 1
      %p171 = por %p169, %p170
      %p172 = scmp.ne.s32.totalorder %s164, %s167
      %p173 = scmp.eq.s32.totalorder %s23, 0
      %p174 = por %p172, %p173
      %p175 = scmp.ne.s32.totalorder %s164, %s167
      %p176 = scmp.eq.s32.totalorder %s28, 1
      %p177 = por %p175, %p176
      %p178 = scmp.ne.s32.totalorder %s167, %s168
      %p179 = scmp.eq.s32.totalorder %s28, 0
      %p180 = por %p178, %p179
      %p181 = scmp.ne.s32.totalorder %s167, %s168
      %p182 = scmp.eq.s32.totalorder %s29, 1
      %p183 = por %p181, %p182
      %p185 = scmp.ne.s32.totalorder %s168, %s184
      %p186 = scmp.eq.s32.totalorder %s29, 0
      %p187 = por %p185, %p186
      %s189 = sadd.s32 %s188, 1
      %p192 = scmp.eq.s32.totalorder %s23, 1
      %p193 = scmp.ne.s32.totalorder %s188, %s190
      %p194 = scmp.eq.s32.totalorder %s23, 0
      %p195 = por %p193, %p194
      %p196 = scmp.ne.s32.totalorder %s188, %s190
      %p197 = scmp.eq.s32.totalorder %s28, 1
      %p198 = por %p196, %p197
      %p199 = scmp.ne.s32.totalorder %s190, %s191
      %p200 = scmp.eq.s32.totalorder %s28, 0
      %p201 = por %p199, %p200
      %p202 = scmp.ne.s32.totalorder %s190, %s191
      %p203 = scmp.eq.s32.totalorder %s29, 1
      %p204 = por %p202, %p203
      %p206 = scmp.ne.s32.totalorder %s191, %s205
      %p207 = scmp.eq.s32.totalorder %s29, 0
      %p208 = por %p206, %p207
      %p209 = scmp.le.s32.totalorder 1, %s23
      %p210 = scmp.lt.s32.totalorder %s23, 3
      %p211 = pnand %p209, %p210
      %p212 = pneg %p211
      // Predicated region
      $region9: #{tpu_custom_call.1} parent=5 // pred_check
        _
      $region10: #{tpu_custom_call.1} parent=5 // pred_check_branch
        %214 = sbr.rel (%p211) target = $region12
      $region11: #{tpu_custom_call.1} parent=5 // pred_region
        %s215 = ssub.s32 %s23, 1
        // Predicated region
        $region13: #{tpu_custom_call.1} parent=11 // pred_check
          %p216 = pneg %p70
        $region14: #{tpu_custom_call.1} parent=11 // pred_check_branch
          %218 = sbr.rel (%p216) target = $region16
        $region15: #{tpu_custom_call.1} parent=11 // pred_region
          %s220 = ssub.s32 128, 128
          %221 = vsyncadd [#allocation6], %s220
          %s223 = sshll.u32 [#allocation5], 4
          %s224 = int_to_ptr.vmem [resolvable:$true] %s223
          %226 = dma.hbm_to_vmem [thread:$0]  %s1, 128, %s224, [#allocation6]
        $region16: #{tpu_custom_call.1} parent=11 // pred_fallthru
          _
        // Predicated region
        $region17: #{tpu_custom_call.1} parent=11 // pred_check
          %p227 = pneg %p91
        $region18: #{tpu_custom_call.1} parent=11 // pred_check_branch
          %229 = sbr.rel (%p227) target = $region20
        $region19: #{tpu_custom_call.1} parent=11 // pred_region
          %s231 = ssub.s32 4096, 4096
          %232 = vsyncadd [#allocation6], %s231
          %s233 = sshll.u32 [#allocation7], 4
          %s234 = int_to_ptr.vmem [resolvable:$true] %s233
          %239 = dma.hbm_to_vmem [thread:$0]  %s2, 4096, %s234, [#allocation6], 64, 64, 4
        $region20: #{tpu_custom_call.1} parent=11 // pred_fallthru
          _
        // Predicated region
        $region21: #{tpu_custom_call.1} parent=11 // pred_check
          %p240 = pneg %p112
        $region22: #{tpu_custom_call.1} parent=11 // pred_check_branch
          %242 = sbr.rel (%p240) target = $region24
        $region23: #{tpu_custom_call.1} parent=11 // pred_region
          %s244 = ssub.s32 2048, 2048
          %245 = vsyncadd [#allocation9], %s244
          %s246 = sshll.u32 [#allocation8], 4
          %s247 = int_to_ptr.vmem [resolvable:$true] %s246
          %252 = dma.hbm_to_vmem [thread:$0]  %s3, 2048, %s247, [#allocation9], 128, 128, 8
        $region24: #{tpu_custom_call.1} parent=11 // pred_fallthru
          _
        // Predicated region
        $region25: #{tpu_custom_call.1} parent=11 // pred_check
          %p253 = pneg %p133
        $region26: #{tpu_custom_call.1} parent=11 // pred_check_branch
          %255 = sbr.rel (%p253) target = $region28
        $region27: #{tpu_custom_call.1} parent=11 // pred_region
          _
        $region28: #{tpu_custom_call.1} parent=11 // pred_fallthru
          _
        // Predicated region
        $region29: #{tpu_custom_call.1} parent=11 // pred_check
          %p256 = pneg %p154
        $region30: #{tpu_custom_call.1} parent=11 // pred_check_branch
          %258 = sbr.rel (%p256) target = $region32
        $region31: #{tpu_custom_call.1} parent=11 // pred_region
          _
        $region32: #{tpu_custom_call.1} parent=11 // pred_fallthru
          _
      $region12: #{tpu_custom_call.1} parent=5 // pred_fallthru
        _
      %p259 = scmp.lt.s32.totalorder %s23, 2
      // Predicated region
      $region33: #{tpu_custom_call.1} parent=5 // pred_check
        %p260 = pneg %p259
      $region34: #{tpu_custom_call.1} parent=5 // pred_check_branch
        %262 = sbr.rel (%p260) target = $region36
      $region35: #{tpu_custom_call.1} parent=5 // pred_region
        // Predicated region
        $region37: #{tpu_custom_call.1} parent=35 // pred_check
          %p263 = pneg %p43
        $region38: #{tpu_custom_call.1} parent=35 // pred_check_branch
          %265 = sbr.rel (%p263) target = $region40
        $region39: #{tpu_custom_call.1} parent=35 // pred_region
          %s266 = sand.u32 %s33, 1
          %s267 = scalar_lea.sflag [#allocation3], %s266
          %s268 = sand.u32 %s33, 1
          %s269 = smul.addr %s268, 128
          %s270 = scalar_lea.vmem [#allocation2], %s269
          %s271 = smul.u32 8, %s23
          %s273 = ssub.s32 2048, 2048
          %274 = vsyncadd %s267, %s273
          %s275 = smul.addr %s271, 4
          %s276 = smul.addr %s275, 64
          %s277 = scalar_lea.hbm %s0, %s276
          %s278 = sshll.u32 %s270, 4
          %s279 = int_to_ptr.vmem [resolvable:$true] %s278
          %284 = dma.hbm_to_vmem [thread:$0]  %s277, 2048, %s279, %s267, 256, 256, 16
        $region40: #{tpu_custom_call.1} parent=35 // pred_fallthru
          _
      $region36: #{tpu_custom_call.1} parent=5 // pred_fallthru
        _
      %p285 = scmp.le.s32.totalorder 1, %s23
      %p286 = scmp.lt.s32.totalorder %s23, 3
      %p287 = pnand %p285, %p286
      %p288 = pneg %p287
      // Predicated region
      $region41: #{tpu_custom_call.1} parent=5 // pred_check
        _
      $region42: #{tpu_custom_call.1} parent=5 // pred_check_branch
        %290 = sbr.rel (%p287) target = $region44
      $region43: #{tpu_custom_call.1} parent=5 // pred_region
        %s291 = ssub.s32 %s23, 1
        %s292 = sand.u32 %s36, 1
        %s293 = scalar_lea.sflag [#allocation3], %s292
        %s294 = sand.u32 %s36, 1
        %s295 = smul.addr %s294, 128
        %s296 = scalar_lea.vmem [#allocation2], %s295
        // Predicated region
        $region45: #{tpu_custom_call.1} parent=43 // pred_check
          %p297 = pneg %p49
        $region46: #{tpu_custom_call.1} parent=43 // pred_check_branch
          %299 = sbr.rel (%p297) target = $region48
        $region47: #{tpu_custom_call.1} parent=43 // pred_region
          %300 = dma.done %s293, 2048
        $region48: #{tpu_custom_call.1} parent=43 // pred_fallthru
          _
        // Predicated region
        $region49: #{tpu_custom_call.1} parent=43 // pred_check
          %p301 = pneg %p70
        $region50: #{tpu_custom_call.1} parent=43 // pred_check_branch
          %303 = sbr.rel (%p301) target = $region52
        $region51: #{tpu_custom_call.1} parent=43 // pred_region
          %304 = dma.done [#allocation6], 128
        $region52: #{tpu_custom_call.1} parent=43 // pred_fallthru
          _
        // Predicated region
        $region53: #{tpu_custom_call.1} parent=43 // pred_check
          %p305 = pneg %p91
        $region54: #{tpu_custom_call.1} parent=43 // pred_check_branch
          %307 = sbr.rel (%p305) target = $region56
        $region55: #{tpu_custom_call.1} parent=43 // pred_region
          %308 = dma.done [#allocation6], 4096
        $region56: #{tpu_custom_call.1} parent=43 // pred_fallthru
          _
        // Predicated region
        $region57: #{tpu_custom_call.1} parent=43 // pred_check
          %p309 = pneg %p112
        $region58: #{tpu_custom_call.1} parent=43 // pred_check_branch
          %311 = sbr.rel (%p309) target = $region60
        $region59: #{tpu_custom_call.1} parent=43 // pred_region
          %312 = dma.done [#allocation9], 2048
        $region60: #{tpu_custom_call.1} parent=43 // pred_fallthru
          _
        %s313 = sand.u32 %s36, 1
        %s314 = scalar_lea.sflag [#allocation3], %s313
        %s315 = sand.u32 %s36, 1
        %s316 = smul.addr %s315, 128
        %s317 = scalar_lea.vmem [#allocation2], %s316
        %p318 = pneg %p49
        %p319 = pneg %p46
        %p320 = pneg %p70
        %p321 = pneg %p67
        %p322 = pneg %p91
        %p323 = pneg %p88
        %p324 = pneg %p112
        %p325 = pneg %p109
        %p326 = pneg %p133
        %p327 = pneg %p130
        %p328 = pneg %p154
        %p329 = pneg %p151
        %p330 = pneg %p180
        %p331 = pneg %p177
        %s332 = sand.u32 %s167, 1
        %s333 = scalar_lea.sflag [#allocation4], %s332
        %s334 = sand.u32 %s167, 1
        %s335 = smul.addr %s334, 64
        %s336 = scalar_lea.vmem [#allocation10], %s335
        %p337 = pneg %p201
        %p338 = pneg %p198
        %s339 = smul.u32 8, %s28
        %s340 = smul.u32 8, %s28
        %p342 = scmp.eq.s32.totalorder %s28, 0
        // Predicated region
        $region61: #{tpu_custom_call.1} parent=43 // pred_check
          %p343 = pneg %p342
        $region62: #{tpu_custom_call.1} parent=43 // pred_check_branch
          %345 = sbr.rel (%p343) target = $region64
        $region63: #{tpu_custom_call.1} parent=43 // pred_region
          %v346 = vld [vmem:[#allocation5] sm:$0xff]
          %347 = vst [vmem:[#allocation11] sm:$0xff] %v346
        $region64: #{tpu_custom_call.1} parent=43 // pred_fallthru
          _
        %v348 = vld [vmem:[%s296] sm:$0xff]
        %v349 = vld [vmem:[%s296 + $0x8] sm:$0xff]
        %v350 = vld [vmem:[%s296 + $0x10] sm:$0xff]
        %v351 = vld [vmem:[%s296 + $0x18] sm:$0xff]
        %v352 = vld [vmem:[%s296 + $0x20] sm:$0xff]
        %v353 = vld [vmem:[%s296 + $0x28] sm:$0xff]
        %v354 = vld [vmem:[%s296 + $0x30] sm:$0xff]
        %v355 = vld [vmem:[%s296 + $0x38] sm:$0xff]
        %v356 = vld [vmem:[%s296 + $0x40] sm:$0xff]
        %v357 = vld [vmem:[%s296 + $0x48] sm:$0xff]
        %v358 = vld [vmem:[%s296 + $0x50] sm:$0xff]
        %v359 = vld [vmem:[%s296 + $0x58] sm:$0xff]
        %v360 = vld [vmem:[%s296 + $0x60] sm:$0xff]
        %v361 = vld [vmem:[%s296 + $0x68] sm:$0xff]
        %v362 = vld [vmem:[%s296 + $0x70] sm:$0xff]
        %v363 = vld [vmem:[%s296 + $0x78] sm:$0xff]
        %v364 = vld [vmem:[#allocation7] sm:$0xf]
        %v365 = vld [vmem:[#allocation7 + $0x4] sm:$0xf]
        %v366 = vld [vmem:[#allocation7 + $0x8] sm:$0xf]
        %v367 = vld [vmem:[#allocation7 + $0xc] sm:$0xf]
        %v368 = vld [vmem:[#allocation7 + $0x10] sm:$0xf]
        %v369 = vld [vmem:[#allocation7 + $0x14] sm:$0xf]
        %v370 = vld [vmem:[#allocation7 + $0x18] sm:$0xf]
        %v371 = vld [vmem:[#allocation7 + $0x1c] sm:$0xf]
        %v372 = vld [vmem:[#allocation7 + $0x20] sm:$0xf]
        %v373 = vld [vmem:[#allocation7 + $0x24] sm:$0xf]
        %v374 = vld [vmem:[#allocation7 + $0x28] sm:$0xf]
        %v375 = vld [vmem:[#allocation7 + $0x2c] sm:$0xf]
        %v376 = vld [vmem:[#allocation7 + $0x30] sm:$0xf]
        %v377 = vld [vmem:[#allocation7 + $0x34] sm:$0xf]
        %v378 = vld [vmem:[#allocation7 + $0x38] sm:$0xf]
        %v379 = vld [vmem:[#allocation7 + $0x3c] sm:$0xf]
        %v380 = vld [vmem:[#allocation7 + $0x40] sm:$0xf]
        %v381 = vld [vmem:[#allocation7 + $0x44] sm:$0xf]
        %v382 = vld [vmem:[#allocation7 + $0x48] sm:$0xf]
        %v383 = vld [vmem:[#allocation7 + $0x4c] sm:$0xf]
        %v384 = vld [vmem:[#allocation7 + $0x50] sm:$0xf]
        %v385 = vld [vmem:[#allocation7 + $0x54] sm:$0xf]
        %v386 = vld [vmem:[#allocation7 + $0x58] sm:$0xf]
        %v387 = vld [vmem:[#allocation7 + $0x5c] sm:$0xf]
        %v388 = vld [vmem:[#allocation7 + $0x60] sm:$0xf]
        %v389 = vld [vmem:[#allocation7 + $0x64] sm:$0xf]
        %v390 = vld [vmem:[#allocation7 + $0x68] sm:$0xf]
        %v391 = vld [vmem:[#allocation7 + $0x6c] sm:$0xf]
        %v392 = vld [vmem:[#allocation7 + $0x70] sm:$0xf]
        %v393 = vld [vmem:[#allocation7 + $0x74] sm:$0xf]
        %v394 = vld [vmem:[#allocation7 + $0x78] sm:$0xf]
        %v395 = vld [vmem:[#allocation7 + $0x7c] sm:$0xf]
        %v396 = vld [vmem:[#allocation7 + $0x80] sm:$0xf]
        %v397 = vld [vmem:[#allocation7 + $0x84] sm:$0xf]
        %v398 = vld [vmem:[#allocation7 + $0x88] sm:$0xf]
        %v399 = vld [vmem:[#allocation7 + $0x8c] sm:$0xf]
        %v400 = vld [vmem:[#allocation7 + $0x90] sm:$0xf]
        %v401 = vld [vmem:[#allocation7 + $0x94] sm:$0xf]
        %v402 = vld [vmem:[#allocation7 + $0x98] sm:$0xf]
        %v403 = vld [vmem:[#allocation7 + $0x9c] sm:$0xf]
        %v404 = vld [vmem:[#allocation7 + $0xa0] sm:$0xf]
        %v405 = vld [vmem:[#allocation7 + $0xa4] sm:$0xf]
        %v406 = vld [vmem:[#allocation7 + $0xa8] sm:$0xf]
        %v407 = vld [vmem:[#allocation7 + $0xac] sm:$0xf]
        %v408 = vld [vmem:[#allocation7 + $0xb0] sm:$0xf]
        %v409 = vld [vmem:[#allocation7 + $0xb4] sm:$0xf]
        %v410 = vld [vmem:[#allocation7 + $0xb8] sm:$0xf]
        %v411 = vld [vmem:[#allocation7 + $0xbc] sm:$0xf]
        %v412 = vld [vmem:[#allocation7 + $0xc0] sm:$0xf]
        %v413 = vld [vmem:[#allocation7 + $0xc4] sm:$0xf]
        %v414 = vld [vmem:[#allocation7 + $0xc8] sm:$0xf]
        %v415 = vld [vmem:[#allocation7 + $0xcc] sm:$0xf]
        %v416 = vld [vmem:[#allocation7 + $0xd0] sm:$0xf]
        %v417 = vld [vmem:[#allocation7 + $0xd4] sm:$0xf]
        %v418 = vld [vmem:[#allocation7 + $0xd8] sm:$0xf]
        %v419 = vld [vmem:[#allocation7 + $0xdc] sm:$0xf]
        %v420 = vld [vmem:[#allocation7 + $0xe0] sm:$0xf]
        %v421 = vld [vmem:[#allocation7 + $0xe4] sm:$0xf]
        %v422 = vld [vmem:[#allocation7 + $0xe8] sm:$0xf]
        %v423 = vld [vmem:[#allocation7 + $0xec] sm:$0xf]
        %v424 = vld [vmem:[#allocation7 + $0xf0] sm:$0xf]
        %v425 = vld [vmem:[#allocation7 + $0xf4] sm:$0xf]
        %v426 = vld [vmem:[#allocation7 + $0xf8] sm:$0xf]
        %v427 = vld [vmem:[#allocation7 + $0xfc] sm:$0xf]
        %v428 = vld [vmem:[%s4] sm:$0x1]
        %v430 = vlaneseq
        %v431 = vshrl.u32 %v430, 7
        %v432 = vsub.s32 0, %v431
        %v433 = vrot.slane %v428, %v432
        %v451 = vunpack.c.l.b16 %v348
        %v452 = vunpack.c.h.b16 %v348
        %v453 = vunpack.c.l.b16 %v349
        %v454 = vunpack.c.h.b16 %v349
        %v455 = vunpack.c.l.b16 %v350
        %v456 = vunpack.c.h.b16 %v350
        %v457 = vunpack.c.l.b16 %v351
        %v458 = vunpack.c.h.b16 %v351
        %v459 = vunpack.c.l.b16 %v352
        %v460 = vunpack.c.h.b16 %v352
        %v461 = vunpack.c.l.b16 %v353
        %v462 = vunpack.c.h.b16 %v353
        %v463 = vunpack.c.l.b16 %v354
        %v464 = vunpack.c.h.b16 %v354
        %v465 = vunpack.c.l.b16 %v355
        %v466 = vunpack.c.h.b16 %v355
        %v467 = vunpack.c.l.b16 %v356
        %v468 = vunpack.c.h.b16 %v356
        %v469 = vunpack.c.l.b16 %v357
        %v470 = vunpack.c.h.b16 %v357
        %v471 = vunpack.c.l.b16 %v358
        %v472 = vunpack.c.h.b16 %v358
        %v473 = vunpack.c.l.b16 %v359
        %v474 = vunpack.c.h.b16 %v359
        %v475 = vunpack.c.l.b16 %v360
        %v476 = vunpack.c.h.b16 %v360
        %v477 = vunpack.c.l.b16 %v361
        %v478 = vunpack.c.h.b16 %v361
        %v479 = vunpack.c.l.b16 %v362
        %v480 = vunpack.c.h.b16 %v362
        %v481 = vunpack.c.l.b16 %v363
        %v482 = vunpack.c.h.b16 %v363
        %v483 = vpack.c.b16 %v455, %v451
        %v484 = vpack.c.b16 %v456, %v452
        %v485 = vpack.c.b16 %v457, %v453
        %v486 = vpack.c.b16 %v458, %v454
        %v487 = vpack.c.b16 %v463, %v459
        %v488 = vpack.c.b16 %v464, %v460
        %v489 = vpack.c.b16 %v465, %v461
        %v490 = vpack.c.b16 %v466, %v462
        %v491 = vpack.c.b16 %v471, %v467
        %v492 = vpack.c.b16 %v472, %v468
        %v493 = vpack.c.b16 %v473, %v469
        %v494 = vpack.c.b16 %v474, %v470
        %v495 = vpack.c.b16 %v479, %v475
        %v496 = vpack.c.b16 %v480, %v476
        %v497 = vpack.c.b16 %v481, %v477
        %v498 = vpack.c.b16 %v482, %v478
        %v579 = vunpack.c.l.b16 %v364
        %v580 = vunpack.c.l.b16 %v365
        %v581 = vunpack.c.l.b16 %v366
        %v582 = vunpack.c.l.b16 %v367
        %v583 = vunpack.c.l.b16 %v368
        %v584 = vunpack.c.l.b16 %v369
        %v585 = vunpack.c.l.b16 %v370
        %v586 = vunpack.c.l.b16 %v371
        %v587 = vunpack.c.l.b16 %v372
        %v588 = vunpack.c.l.b16 %v373
        %v589 = vunpack.c.l.b16 %v374
        %v590 = vunpack.c.l.b16 %v375
        %v591 = vunpack.c.l.b16 %v376
        %v592 = vunpack.c.l.b16 %v377
        %v593 = vunpack.c.l.b16 %v378
        %v594 = vunpack.c.l.b16 %v379
        %v595 = vunpack.c.l.b16 %v380
        %v596 = vunpack.c.l.b16 %v381
        %v597 = vunpack.c.l.b16 %v382
        %v598 = vunpack.c.l.b16 %v383
        %v599 = vunpack.c.l.b16 %v384
        %v600 = vunpack.c.l.b16 %v385
        %v601 = vunpack.c.l.b16 %v386
        %v602 = vunpack.c.l.b16 %v387
        %v603 = vunpack.c.l.b16 %v388
        %v604 = vunpack.c.l.b16 %v389
        %v605 = vunpack.c.l.b16 %v390
        %v606 = vunpack.c.l.b16 %v391
        %v607 = vunpack.c.l.b16 %v392
        %v608 = vunpack.c.l.b16 %v393
        %v609 = vunpack.c.l.b16 %v394
        %v610 = vunpack.c.l.b16 %v395
        %v611 = vunpack.c.l.b16 %v396
        %v612 = vunpack.c.l.b16 %v397
        %v613 = vunpack.c.l.b16 %v398
        %v614 = vunpack.c.l.b16 %v399
        %v615 = vunpack.c.l.b16 %v400
        %v616 = vunpack.c.l.b16 %v401
        %v617 = vunpack.c.l.b16 %v402
        %v618 = vunpack.c.l.b16 %v403
        %v619 = vunpack.c.l.b16 %v404
        %v620 = vunpack.c.l.b16 %v405
        %v621 = vunpack.c.l.b16 %v406
        %v622 = vunpack.c.l.b16 %v407
        %v623 = vunpack.c.l.b16 %v408
        %v624 = vunpack.c.l.b16 %v409
        %v625 = vunpack.c.l.b16 %v410
        %v626 = vunpack.c.l.b16 %v411
        %v627 = vunpack.c.l.b16 %v412
        %v628 = vunpack.c.l.b16 %v413
        %v629 = vunpack.c.l.b16 %v414
        %v630 = vunpack.c.l.b16 %v415
        %v631 = vunpack.c.l.b16 %v416
        %v632 = vunpack.c.l.b16 %v417
        %v633 = vunpack.c.l.b16 %v418
        %v634 = vunpack.c.l.b16 %v419
        %v635 = vunpack.c.l.b16 %v420
        %v636 = vunpack.c.l.b16 %v421
        %v637 = vunpack.c.l.b16 %v422
        %v638 = vunpack.c.l.b16 %v423
        %v639 = vunpack.c.l.b16 %v424
        %v640 = vunpack.c.l.b16 %v425
        %v641 = vunpack.c.l.b16 %v426
        %v642 = vunpack.c.l.b16 %v427
        %v643 = vpack.c.b16 %v580, %v579
        %v644 = vpack.c.b16 %v582, %v581
        %v645 = vpack.c.b16 %v584, %v583
        %v646 = vpack.c.b16 %v586, %v585
        %v647 = vpack.c.b16 %v588, %v587
        %v648 = vpack.c.b16 %v590, %v589
        %v649 = vpack.c.b16 %v592, %v591
        %v650 = vpack.c.b16 %v594, %v593
        %v651 = vpack.c.b16 %v596, %v595
        %v652 = vpack.c.b16 %v598, %v597
        %v653 = vpack.c.b16 %v600, %v599
        %v654 = vpack.c.b16 %v602, %v601
        %v655 = vpack.c.b16 %v604, %v603
        %v656 = vpack.c.b16 %v606, %v605
        %v657 = vpack.c.b16 %v608, %v607
        %v658 = vpack.c.b16 %v610, %v609
        %v659 = vpack.c.b16 %v612, %v611
        %v660 = vpack.c.b16 %v614, %v613
        %v661 = vpack.c.b16 %v616, %v615
        %v662 = vpack.c.b16 %v618, %v617
        %v663 = vpack.c.b16 %v620, %v619
        %v664 = vpack.c.b16 %v622, %v621
        %v665 = vpack.c.b16 %v624, %v623
        %v666 = vpack.c.b16 %v626, %v625
        %v667 = vpack.c.b16 %v628, %v627
        %v668 = vpack.c.b16 %v630, %v629
        %v669 = vpack.c.b16 %v632, %v631
        %v670 = vpack.c.b16 %v634, %v633
        %v671 = vpack.c.b16 %v636, %v635
        %v672 = vpack.c.b16 %v638, %v637
        %v673 = vpack.c.b16 %v640, %v639
        %v674 = vpack.c.b16 %v642, %v641
        %707 = vmatprep.subr.bf16.mxu0 0
        %708 = vmatpush1.bf16.msra.mxu0 %v650
        %709 = vmatprep.subr.bf16.mxu0 0
        %710 = vmatpush1.bf16.msra.mxu0 %v649
        %711 = vmatprep.subr.bf16.mxu0 0
        %712 = vmatpush1.bf16.msra.mxu0 %v648
        %713 = vmatprep.subr.bf16.mxu0 0
        %714 = vmatpush1.bf16.msra.mxu0 %v647
        %715 = vmatprep.subr.bf16.mxu0 0
        %716 = vmatpush1.bf16.msra.mxu0 %v646
        %717 = vmatprep.subr.bf16.mxu0 0
        %718 = vmatpush1.bf16.msra.mxu0 %v645
        %719 = vmatprep.subr.bf16.mxu0 0
        %720 = vmatpush1.bf16.msra.mxu0 %v644
        %721 = vmatprep.subr.bf16.mxu0 0
        %722 = vmatpush1.bf16.msra.mxu0 %v643
        %723 = vmatprep.subr.bf16.mxu0 0
        %724 = vmatpush2.bf16.msra.mxu0 %v658
        %725 = vmatprep.subr.bf16.mxu0 0
        %726 = vmatpush2.bf16.msra.mxu0 %v657
        %727 = vmatprep.subr.bf16.mxu0 0
        %728 = vmatpush2.bf16.msra.mxu0 %v656
        %729 = vmatprep.subr.bf16.mxu0 0
        %730 = vmatpush2.bf16.msra.mxu0 %v655
        %731 = vmatprep.subr.bf16.mxu0 0
        %732 = vmatpush2.bf16.msra.mxu0 %v654
        %733 = vmatprep.subr.bf16.mxu0 0
        %734 = vmatpush2.bf16.msra.mxu0 %v653
        %735 = vmatprep.subr.bf16.mxu0 0
        %736 = vmatpush2.bf16.msra.mxu0 %v652
        %737 = vmatprep.subr.bf16.mxu0 0
        %738 = vmatpush2.bf16.msra.mxu0 %v651
        %739 = vmatprep.mubr.bf16.mxu0 %v484
        %740 = vmatmul.mubr.bf16.gmra.mxu0 %v483
        %v741 = vpop.f32.mrf.mxu0
        %v742 = vadd.f32 %v433, %v741
        %v743 = vpop.f32.mrf.mxu0
        %v744 = vpop.f32.mrf.mxu0
        %v745 = vadd.f32 %v433, %v744
        %v746 = vpop.f32.mrf.mxu0
        %747 = vmatprep.mubr.bf16.mxu0 %v488
        %748 = vmatmul.mubr.bf16.gmra.mxu0 %v487
        %v749 = vpop.f32.mrf.mxu0
        %v750 = vadd.f32 %v433, %v749
        %v751 = vpop.f32.mrf.mxu0
        %v752 = vpop.f32.mrf.mxu0
        %v753 = vadd.f32 %v433, %v752
        %v754 = vpop.f32.mrf.mxu0
        %755 = vmatprep.mubr.bf16.mxu0 %v492
        %756 = vmatmul.mubr.bf16.gmra.mxu0 %v491
        %v757 = vpop.f32.mrf.mxu0
        %v758 = vadd.f32 %v433, %v757
        %v759 = vpop.f32.mrf.mxu0
        %v760 = vpop.f32.mrf.mxu0
        %v761 = vadd.f32 %v433, %v760
        %v762 = vpop.f32.mrf.mxu0
        %763 = vmatprep.mubr.bf16.mxu0 %v496
        %764 = vmatmul.mubr.bf16.gmra.mxu0 %v495
        %v765 = vpop.f32.mrf.mxu0
        %v766 = vadd.f32 %v433, %v765
        %v767 = vpop.f32.mrf.mxu0
        %v768 = vpop.f32.mrf.mxu0
        %v769 = vadd.f32 %v433, %v768
        %v770 = vpop.f32.mrf.mxu0
        %771 = vdwg.mxu0
        %772 = vmatprep.subr.bf16.mxu0 0
        %773 = vmatpush1.bf16.msra.mxu0 %v666
        %774 = vmatprep.subr.bf16.mxu0 0
        %775 = vmatpush1.bf16.msra.mxu0 %v665
        %776 = vmatprep.subr.bf16.mxu0 0
        %777 = vmatpush1.bf16.msra.mxu0 %v664
        %778 = vmatprep.subr.bf16.mxu0 0
        %779 = vmatpush1.bf16.msra.mxu0 %v663
        %780 = vmatprep.subr.bf16.mxu0 0
        %781 = vmatpush1.bf16.msra.mxu0 %v662
        %782 = vmatprep.subr.bf16.mxu0 0
        %783 = vmatpush1.bf16.msra.mxu0 %v661
        %784 = vmatprep.subr.bf16.mxu0 0
        %785 = vmatpush1.bf16.msra.mxu0 %v660
        %786 = vmatprep.subr.bf16.mxu0 0
        %787 = vmatpush1.bf16.msra.mxu0 %v659
        %788 = vmatprep.subr.bf16.mxu0 0
        %789 = vmatpush2.bf16.msra.mxu0 %v674
        %790 = vmatprep.subr.bf16.mxu0 0
        %791 = vmatpush2.bf16.msra.mxu0 %v673
        %792 = vmatprep.subr.bf16.mxu0 0
        %793 = vmatpush2.bf16.msra.mxu0 %v672
        %794 = vmatprep.subr.bf16.mxu0 0
        %795 = vmatpush2.bf16.msra.mxu0 %v671
        %796 = vmatprep.subr.bf16.mxu0 0
        %797 = vmatpush2.bf16.msra.mxu0 %v670
        %798 = vmatprep.subr.bf16.mxu0 0
        %799 = vmatpush2.bf16.msra.mxu0 %v669
        %800 = vmatprep.subr.bf16.mxu0 0
        %801 = vmatpush2.bf16.msra.mxu0 %v668
        %802 = vmatprep.subr.bf16.mxu0 0
        %803 = vmatpush2.bf16.msra.mxu0 %v667
        %804 = vmatprep.mubr.bf16.mxu0 %v486
        %805 = vmatmul.mubr.bf16.gmra.mxu0 %v485
        %v806 = vpop.f32.mrf.mxu0
        %v807 = vadd.f32 %v742, %v806
        %v808 = vpop.f32.mrf.mxu0
        %v809 = vpop.f32.mrf.mxu0
        %v810 = vadd.f32 %v745, %v809
        %v811 = vpop.f32.mrf.mxu0
        %812 = vmatprep.mubr.bf16.mxu0 %v490
        %813 = vmatmul.mubr.bf16.gmra.mxu0 %v489
        %v814 = vpop.f32.mrf.mxu0
        %v815 = vadd.f32 %v750, %v814
        %v816 = vpop.f32.mrf.mxu0
        %v817 = vpop.f32.mrf.mxu0
        %v818 = vadd.f32 %v753, %v817
        %v819 = vpop.f32.mrf.mxu0
        %820 = vmatprep.mubr.bf16.mxu0 %v494
        %821 = vmatmul.mubr.bf16.gmra.mxu0 %v493
        %v822 = vpop.f32.mrf.mxu0
        %v823 = vadd.f32 %v758, %v822
        %v824 = vpop.f32.mrf.mxu0
        %v825 = vpop.f32.mrf.mxu0
        %v826 = vadd.f32 %v761, %v825
        %v827 = vpop.f32.mrf.mxu0
        %828 = vmatprep.mubr.bf16.mxu0 %v498
        %829 = vmatmul.mubr.bf16.gmra.mxu0 %v497
        %v830 = vpop.f32.mrf.mxu0
        %v831 = vadd.f32 %v766, %v830
        %v832 = vpop.f32.mrf.mxu0
        %v833 = vpop.f32.mrf.mxu0
        %v834 = vadd.f32 %v769, %v833
        %v835 = vpop.f32.mrf.mxu0
        %836 = vdwg.mxu0
        %v837 = vld [vmem:[#allocation8] sm:$0xff]
        %v838 = vld [vmem:[#allocation8 + $0x8] sm:$0xff]
        %v839 = vld [vmem:[#allocation8 + $0x10] sm:$0xff]
        %v840 = vld [vmem:[#allocation8 + $0x18] sm:$0xff]
        %v841 = vld [vmem:[#allocation8 + $0x20] sm:$0xff]
        %v842 = vld [vmem:[#allocation8 + $0x28] sm:$0xff]
        %v843 = vld [vmem:[#allocation8 + $0x30] sm:$0xff]
        %v844 = vld [vmem:[#allocation8 + $0x38] sm:$0xff]
        %v845 = vld [vmem:[#allocation8 + $0x40] sm:$0xff]
        %v846 = vld [vmem:[#allocation8 + $0x48] sm:$0xff]
        %v847 = vld [vmem:[#allocation8 + $0x50] sm:$0xff]
        %v848 = vld [vmem:[#allocation8 + $0x58] sm:$0xff]
        %v849 = vld [vmem:[#allocation8 + $0x60] sm:$0xff]
        %v850 = vld [vmem:[#allocation8 + $0x68] sm:$0xff]
        %v851 = vld [vmem:[#allocation8 + $0x70] sm:$0xff]
        %v852 = vld [vmem:[#allocation8 + $0x78] sm:$0xff]
        %v853 = vld [vmem:[%s5] sm:$0x1]
        %v855 = vlaneseq
        %v856 = vshrl.u32 %v855, 7
        %v857 = vsub.s32 0, %v856
        %v858 = vrot.slane %v853, %v857
        %v860 = vld [vmem:[#allocation11] sm:$0xff]
        %v861 = vpack.c.bf16 %v860, %v860
        %v878 = vunpack.c.l.b16 %v837
        %v879 = vunpack.c.h.b16 %v837
        %v880 = vunpack.c.l.b16 %v838
        %v881 = vunpack.c.h.b16 %v838
        %v882 = vunpack.c.l.b16 %v839
        %v883 = vunpack.c.h.b16 %v839
        %v884 = vunpack.c.l.b16 %v840
        %v885 = vunpack.c.h.b16 %v840
        %v886 = vunpack.c.l.b16 %v841
        %v887 = vunpack.c.h.b16 %v841
        %v888 = vunpack.c.l.b16 %v842
        %v889 = vunpack.c.h.b16 %v842
        %v890 = vunpack.c.l.b16 %v843
        %v891 = vunpack.c.h.b16 %v843
        %v892 = vunpack.c.l.b16 %v844
        %v893 = vunpack.c.h.b16 %v844
        %v894 = vunpack.c.l.b16 %v845
        %v895 = vunpack.c.h.b16 %v845
        %v896 = vunpack.c.l.b16 %v846
        %v897 = vunpack.c.h.b16 %v846
        %v898 = vunpack.c.l.b16 %v847
        %v899 = vunpack.c.h.b16 %v847
        %v900 = vunpack.c.l.b16 %v848
        %v901 = vunpack.c.h.b16 %v848
        %v902 = vunpack.c.l.b16 %v849
        %v903 = vunpack.c.h.b16 %v849
        %v904 = vunpack.c.l.b16 %v850
        %v905 = vunpack.c.h.b16 %v850
        %v906 = vunpack.c.l.b16 %v851
        %v907 = vunpack.c.h.b16 %v851
        %v908 = vunpack.c.l.b16 %v852
        %v909 = vunpack.c.h.b16 %v852
        %v910 = vpack.c.b16 %v880, %v878
        %v911 = vpack.c.b16 %v881, %v879
        %v912 = vpack.c.b16 %v884, %v882
        %v913 = vpack.c.b16 %v885, %v883
        %v914 = vpack.c.b16 %v888, %v886
        %v915 = vpack.c.b16 %v889, %v887
        %v916 = vpack.c.b16 %v892, %v890
        %v917 = vpack.c.b16 %v893, %v891
        %v918 = vpack.c.b16 %v896, %v894
        %v919 = vpack.c.b16 %v897, %v895
        %v920 = vpack.c.b16 %v900, %v898
        %v921 = vpack.c.b16 %v901, %v899
        %v922 = vpack.c.b16 %v904, %v902
        %v923 = vpack.c.b16 %v905, %v903
        %v924 = vpack.c.b16 %v908, %v906
        %v925 = vpack.c.b16 %v909, %v907
        %942 = vmatprep.subr.bf16.mxu0 %v925
        %943 = vmatpush1.bf16.msra.mxu0 %v924
        %944 = vmatprep.subr.bf16.mxu0 %v923
        %945 = vmatpush1.bf16.msra.mxu0 %v922
        %946 = vmatprep.subr.bf16.mxu0 %v921
        %947 = vmatpush1.bf16.msra.mxu0 %v920
        %948 = vmatprep.subr.bf16.mxu0 %v919
        %949 = vmatpush1.bf16.msra.mxu0 %v918
        %950 = vmatprep.subr.bf16.mxu0 %v917
        %951 = vmatpush1.bf16.msra.mxu0 %v916
        %952 = vmatprep.subr.bf16.mxu0 %v915
        %953 = vmatpush1.bf16.msra.mxu0 %v914
        %954 = vmatprep.subr.bf16.mxu0 %v913
        %955 = vmatpush1.bf16.msra.mxu0 %v912
        %956 = vmatprep.subr.bf16.mxu0 %v911
        %957 = vmatpush1.bf16.msra.mxu0 %v910
        %958 = vmatprep.subr.bf16.mxu0 0
        %959 = vmatpush2.bf16.msra.mxu0 0
        %960 = vmatprep.subr.bf16.mxu0 0
        %961 = vmatpush2.bf16.msra.mxu0 0
        %962 = vmatprep.subr.bf16.mxu0 0
        %963 = vmatpush2.bf16.msra.mxu0 0
        %964 = vmatprep.subr.bf16.mxu0 0
        %965 = vmatpush2.bf16.msra.mxu0 0
        %966 = vmatprep.subr.bf16.mxu0 0
        %967 = vmatpush2.bf16.msra.mxu0 0
        %968 = vmatprep.subr.bf16.mxu0 0
        %969 = vmatpush2.bf16.msra.mxu0 0
        %970 = vmatprep.subr.bf16.mxu0 0
        %971 = vmatpush2.bf16.msra.mxu0 0
        %972 = vmatprep.subr.bf16.mxu0 0
        %973 = vmatpush2.bf16.msra.mxu0 0
        %974 = vmatprep.mubr.bf16.mxu0 0
        %975 = vmatmul.mubr.bf16.gmra.mxu0 %v861
        %v976 = vpop.f32.mrf.mxu0
        %v977 = vadd.f32 0.0, %v976
        %v978 = vpop.f32.mrf.mxu0
        %v979 = vpop.f32.mrf.mxu0
        %v980 = vpop.f32.mrf.mxu0
        %981 = vdwg.mxu0
        %v982 = vadd.f32 %v977, %v807
        %v983 = vmax.f32 %v982, 0.0
        %v984 = vpack.c.bf16 %v983, %v983
        %985 = vmatprep.subr.bf16.mxu0 %v925
        %986 = vmatpush1.bf16.msra.mxu0 %v924
        %987 = vmatprep.subr.bf16.mxu0 %v923
        %988 = vmatpush1.bf16.msra.mxu0 %v922
        %989 = vmatprep.subr.bf16.mxu0 %v921
        %990 = vmatpush1.bf16.msra.mxu0 %v920
        %991 = vmatprep.subr.bf16.mxu0 %v919
        %992 = vmatpush1.bf16.msra.mxu0 %v918
        %993 = vmatprep.subr.bf16.mxu0 %v917
        %994 = vmatpush1.bf16.msra.mxu0 %v916
        %995 = vmatprep.subr.bf16.mxu0 %v915
        %996 = vmatpush1.bf16.msra.mxu0 %v914
        %997 = vmatprep.subr.bf16.mxu0 %v913
        %998 = vmatpush1.bf16.msra.mxu0 %v912
        %999 = vmatprep.subr.bf16.mxu0 %v911
        %1000 = vmatpush1.bf16.msra.mxu0 %v910
        %1001 = vmatprep.subr.bf16.mxu0 0
        %1002 = vmatpush2.bf16.msra.mxu0 0
        %1003 = vmatprep.subr.bf16.mxu0 0
        %1004 = vmatpush2.bf16.msra.mxu0 0
        %1005 = vmatprep.subr.bf16.mxu0 0
        %1006 = vmatpush2.bf16.msra.mxu0 0
        %1007 = vmatprep.subr.bf16.mxu0 0
        %1008 = vmatpush2.bf16.msra.mxu0 0
        %1009 = vmatprep.subr.bf16.mxu0 0
        %1010 = vmatpush2.bf16.msra.mxu0 0
        %1011 = vmatprep.subr.bf16.mxu0 0
        %1012 = vmatpush2.bf16.msra.mxu0 0
        %1013 = vmatprep.subr.bf16.mxu0 0
        %1014 = vmatpush2.bf16.msra.mxu0 0
        %1015 = vmatprep.subr.bf16.mxu0 0
        %1016 = vmatpush2.bf16.msra.mxu0 0
        %1017 = vmatprep.mubr.bf16.mxu0 0
        %1018 = vmatmul.mubr.bf16.gmra.mxu0 %v984
        %v1019 = vpop.f32.mrf.mxu0
        %v1020 = vadd.f32 0.0, %v1019
        %v1021 = vpop.f32.mrf.mxu0
        %v1022 = vadd.f32 0.0, %v1021
        %v1023 = vpop.f32.mrf.mxu0
        %v1024 = vpop.f32.mrf.mxu0
        %1025 = vdwg.mxu0
        %v1026 = vadd.f32 %v1020, %v810
        %v1027 = vmax.f32 %v1026, 0.0
        %v1028 = vadd.f32 %v1022, %v858
        %1029 = vst [vmem:[%s336] sm:$0xff] %v1028
        %v1030 = vpack.c.bf16 %v1027, %v1027
        %1031 = vmatprep.subr.bf16.mxu0 %v925
        %1032 = vmatpush1.bf16.msra.mxu0 %v924
        %1033 = vmatprep.subr.bf16.mxu0 %v923
        %1034 = vmatpush1.bf16.msra.mxu0 %v922
        %1035 = vmatprep.subr.bf16.mxu0 %v921
        %1036 = vmatpush1.bf16.msra.mxu0 %v920
        %1037 = vmatprep.subr.bf16.mxu0 %v919
        %1038 = vmatpush1.bf16.msra.mxu0 %v918
        %1039 = vmatprep.subr.bf16.mxu0 %v917
        %1040 = vmatpush1.bf16.msra.mxu0 %v916
        %1041 = vmatprep.subr.bf16.mxu0 %v915
        %1042 = vmatpush1.bf16.msra.mxu0 %v914
        %1043 = vmatprep.subr.bf16.mxu0 %v913
        %1044 = vmatpush1.bf16.msra.mxu0 %v912
        %1045 = vmatprep.subr.bf16.mxu0 %v911
        %1046 = vmatpush1.bf16.msra.mxu0 %v910
        %1047 = vmatprep.subr.bf16.mxu0 0
        %1048 = vmatpush2.bf16.msra.mxu0 0
        %1049 = vmatprep.subr.bf16.mxu0 0
        %1050 = vmatpush2.bf16.msra.mxu0 0
        %1051 = vmatprep.subr.bf16.mxu0 0
        %1052 = vmatpush2.bf16.msra.mxu0 0
        %1053 = vmatprep.subr.bf16.mxu0 0
        %1054 = vmatpush2.bf16.msra.mxu0 0
        %1055 = vmatprep.subr.bf16.mxu0 0
        %1056 = vmatpush2.bf16.msra.mxu0 0
        %1057 = vmatprep.subr.bf16.mxu0 0
        %1058 = vmatpush2.bf16.msra.mxu0 0
        %1059 = vmatprep.subr.bf16.mxu0 0
        %1060 = vmatpush2.bf16.msra.mxu0 0
        %1061 = vmatprep.subr.bf16.mxu0 0
        %1062 = vmatpush2.bf16.msra.mxu0 0
        %1063 = vmatprep.mubr.bf16.mxu0 0
        %1064 = vmatmul.mubr.bf16.gmra.mxu0 %v1030
        %v1065 = vpop.f32.mrf.mxu0
        %v1066 = vadd.f32 0.0, %v1065
        %v1067 = vpop.f32.mrf.mxu0
        %v1068 = vadd.f32 0.0, %v1067
        %v1069 = vpop.f32.mrf.mxu0
        %v1070 = vpop.f32.mrf.mxu0
        %1071 = vdwg.mxu0
        %v1072 = vadd.f32 %v1066, %v815
        %v1073 = vmax.f32 %v1072, 0.0
        %v1074 = vadd.f32 %v1068, %v858
        %s1075 = scalar_lea.vmem %s336, 8 [#allocation10]
        %1076 = vst [vmem:[%s1075] sm:$0xff] %v1074
        %v1077 = vpack.c.bf16 %v1073, %v1073
        %1078 = vmatprep.subr.bf16.mxu0 %v925
        %1079 = vmatpush1.bf16.msra.mxu0 %v924
        %1080 = vmatprep.subr.bf16.mxu0 %v923
        %1081 = vmatpush1.bf16.msra.mxu0 %v922
        %1082 = vmatprep.subr.bf16.mxu0 %v921
        %1083 = vmatpush1.bf16.msra.mxu0 %v920
        %1084 = vmatprep.subr.bf16.mxu0 %v919
        %1085 = vmatpush1.bf16.msra.mxu0 %v918
        %1086 = vmatprep.subr.bf16.mxu0 %v917
        %1087 = vmatpush1.bf16.msra.mxu0 %v916
        %1088 = vmatprep.subr.bf16.mxu0 %v915
        %1089 = vmatpush1.bf16.msra.mxu0 %v914
        %1090 = vmatprep.subr.bf16.mxu0 %v913
        %1091 = vmatpush1.bf16.msra.mxu0 %v912
        %1092 = vmatprep.subr.bf16.mxu0 %v911
        %1093 = vmatpush1.bf16.msra.mxu0 %v910
        %1094 = vmatprep.subr.bf16.mxu0 0
        %1095 = vmatpush2.bf16.msra.mxu0 0
        %1096 = vmatprep.subr.bf16.mxu0 0
        %1097 = vmatpush2.bf16.msra.mxu0 0
        %1098 = vmatprep.subr.bf16.mxu0 0
        %1099 = vmatpush2.bf16.msra.mxu0 0
        %1100 = vmatprep.subr.bf16.mxu0 0
        %1101 = vmatpush2.bf16.msra.mxu0 0
        %1102 = vmatprep.subr.bf16.mxu0 0
        %1103 = vmatpush2.bf16.msra.mxu0 0
        %1104 = vmatprep.subr.bf16.mxu0 0
        %1105 = vmatpush2.bf16.msra.mxu0 0
        %1106 = vmatprep.subr.bf16.mxu0 0
        %1107 = vmatpush2.bf16.msra.mxu0 0
        %1108 = vmatprep.subr.bf16.mxu0 0
        %1109 = vmatpush2.bf16.msra.mxu0 0
        %1110 = vmatprep.mubr.bf16.mxu0 0
        %1111 = vmatmul.mubr.bf16.gmra.mxu0 %v1077
        %v1112 = vpop.f32.mrf.mxu0
        %v1113 = vadd.f32 0.0, %v1112
        %v1114 = vpop.f32.mrf.mxu0
        %v1115 = vadd.f32 0.0, %v1114
        %v1116 = vpop.f32.mrf.mxu0
        %v1117 = vpop.f32.mrf.mxu0
        %1118 = vdwg.mxu0
        %v1119 = vadd.f32 %v1113, %v818
        %v1120 = vmax.f32 %v1119, 0.0
        %v1121 = vadd.f32 %v1115, %v858
        %s1122 = scalar_lea.vmem %s336, 16 [#allocation10]
        %1123 = vst [vmem:[%s1122] sm:$0xff] %v1121
        %v1124 = vpack.c.bf16 %v1120, %v1120
        %1125 = vmatprep.subr.bf16.mxu0 %v925
        %1126 = vmatpush1.bf16.msra.mxu0 %v924
        %1127 = vmatprep.subr.bf16.mxu0 %v923
        %1128 = vmatpush1.bf16.msra.mxu0 %v922
        %1129 = vmatprep.subr.bf16.mxu0 %v921
        %1130 = vmatpush1.bf16.msra.mxu0 %v920
        %1131 = vmatprep.subr.bf16.mxu0 %v919
        %1132 = vmatpush1.bf16.msra.mxu0 %v918
        %1133 = vmatprep.subr.bf16.mxu0 %v917
        %1134 = vmatpush1.bf16.msra.mxu0 %v916
        %1135 = vmatprep.subr.bf16.mxu0 %v915
        %1136 = vmatpush1.bf16.msra.mxu0 %v914
        %1137 = vmatprep.subr.bf16.mxu0 %v913
        %1138 = vmatpush1.bf16.msra.mxu0 %v912
        %1139 = vmatprep.subr.bf16.mxu0 %v911
        %1140 = vmatpush1.bf16.msra.mxu0 %v910
        %1141 = vmatprep.subr.bf16.mxu0 0
        %1142 = vmatpush2.bf16.msra.mxu0 0
        %1143 = vmatprep.subr.bf16.mxu0 0
        %1144 = vmatpush2.bf16.msra.mxu0 0
        %1145 = vmatprep.subr.bf16.mxu0 0
        %1146 = vmatpush2.bf16.msra.mxu0 0
        %1147 = vmatprep.subr.bf16.mxu0 0
        %1148 = vmatpush2.bf16.msra.mxu0 0
        %1149 = vmatprep.subr.bf16.mxu0 0
        %1150 = vmatpush2.bf16.msra.mxu0 0
        %1151 = vmatprep.subr.bf16.mxu0 0
        %1152 = vmatpush2.bf16.msra.mxu0 0
        %1153 = vmatprep.subr.bf16.mxu0 0
        %1154 = vmatpush2.bf16.msra.mxu0 0
        %1155 = vmatprep.subr.bf16.mxu0 0
        %1156 = vmatpush2.bf16.msra.mxu0 0
        %1157 = vmatprep.mubr.bf16.mxu0 0
        %1158 = vmatmul.mubr.bf16.gmra.mxu0 %v1124
        %v1159 = vpop.f32.mrf.mxu0
        %v1160 = vadd.f32 0.0, %v1159
        %v1161 = vpop.f32.mrf.mxu0
        %v1162 = vadd.f32 0.0, %v1161
        %v1163 = vpop.f32.mrf.mxu0
        %v1164 = vpop.f32.mrf.mxu0
        %1165 = vdwg.mxu0
        %v1166 = vadd.f32 %v1160, %v823
        %v1167 = vmax.f32 %v1166, 0.0
        %v1168 = vadd.f32 %v1162, %v858
        %s1169 = scalar_lea.vmem %s336, 24 [#allocation10]
        %1170 = vst [vmem:[%s1169] sm:$0xff] %v1168
        %v1171 = vpack.c.bf16 %v1167, %v1167
        %1172 = vmatprep.subr.bf16.mxu0 %v925
        %1173 = vmatpush1.bf16.msra.mxu0 %v924
        %1174 = vmatprep.subr.bf16.mxu0 %v923
        %1175 = vmatpush1.bf16.msra.mxu0 %v922
        %1176 = vmatprep.subr.bf16.mxu0 %v921
        %1177 = vmatpush1.bf16.msra.mxu0 %v920
        %1178 = vmatprep.subr.bf16.mxu0 %v919
        %1179 = vmatpush1.bf16.msra.mxu0 %v918
        %1180 = vmatprep.subr.bf16.mxu0 %v917
        %1181 = vmatpush1.bf16.msra.mxu0 %v916
        %1182 = vmatprep.subr.bf16.mxu0 %v915
        %1183 = vmatpush1.bf16.msra.mxu0 %v914
        %1184 = vmatprep.subr.bf16.mxu0 %v913
        %1185 = vmatpush1.bf16.msra.mxu0 %v912
        %1186 = vmatprep.subr.bf16.mxu0 %v911
        %1187 = vmatpush1.bf16.msra.mxu0 %v910
        %1188 = vmatprep.subr.bf16.mxu0 0
        %1189 = vmatpush2.bf16.msra.mxu0 0
        %1190 = vmatprep.subr.bf16.mxu0 0
        %1191 = vmatpush2.bf16.msra.mxu0 0
        %1192 = vmatprep.subr.bf16.mxu0 0
        %1193 = vmatpush2.bf16.msra.mxu0 0
        %1194 = vmatprep.subr.bf16.mxu0 0
        %1195 = vmatpush2.bf16.msra.mxu0 0
        %1196 = vmatprep.subr.bf16.mxu0 0
        %1197 = vmatpush2.bf16.msra.mxu0 0
        %1198 = vmatprep.subr.bf16.mxu0 0
        %1199 = vmatpush2.bf16.msra.mxu0 0
        %1200 = vmatprep.subr.bf16.mxu0 0
        %1201 = vmatpush2.bf16.msra.mxu0 0
        %1202 = vmatprep.subr.bf16.mxu0 0
        %1203 = vmatpush2.bf16.msra.mxu0 0
        %1204 = vmatprep.mubr.bf16.mxu0 0
        %1205 = vmatmul.mubr.bf16.gmra.mxu0 %v1171
        %v1206 = vpop.f32.mrf.mxu0
        %v1207 = vadd.f32 0.0, %v1206
        %v1208 = vpop.f32.mrf.mxu0
        %v1209 = vadd.f32 0.0, %v1208
        %v1210 = vpop.f32.mrf.mxu0
        %v1211 = vpop.f32.mrf.mxu0
        %1212 = vdwg.mxu0
        %v1213 = vadd.f32 %v1207, %v826
        %v1214 = vmax.f32 %v1213, 0.0
        %v1215 = vadd.f32 %v1209, %v858
        %s1216 = scalar_lea.vmem %s336, 32 [#allocation10]
        %1217 = vst [vmem:[%s1216] sm:$0xff] %v1215
        %v1218 = vpack.c.bf16 %v1214, %v1214
        %1219 = vmatprep.subr.bf16.mxu0 %v925
        %1220 = vmatpush1.bf16.msra.mxu0 %v924
        %1221 = vmatprep.subr.bf16.mxu0 %v923
        %1222 = vmatpush1.bf16.msra.mxu0 %v922
        %1223 = vmatprep.subr.bf16.mxu0 %v921
        %1224 = vmatpush1.bf16.msra.mxu0 %v920
        %1225 = vmatprep.subr.bf16.mxu0 %v919
        %1226 = vmatpush1.bf16.msra.mxu0 %v918
        %1227 = vmatprep.subr.bf16.mxu0 %v917
        %1228 = vmatpush1.bf16.msra.mxu0 %v916
        %1229 = vmatprep.subr.bf16.mxu0 %v915
        %1230 = vmatpush1.bf16.msra.mxu0 %v914
        %1231 = vmatprep.subr.bf16.mxu0 %v913
        %1232 = vmatpush1.bf16.msra.mxu0 %v912
        %1233 = vmatprep.subr.bf16.mxu0 %v911
        %1234 = vmatpush1.bf16.msra.mxu0 %v910
        %1235 = vmatprep.subr.bf16.mxu0 0
        %1236 = vmatpush2.bf16.msra.mxu0 0
        %1237 = vmatprep.subr.bf16.mxu0 0
        %1238 = vmatpush2.bf16.msra.mxu0 0
        %1239 = vmatprep.subr.bf16.mxu0 0
        %1240 = vmatpush2.bf16.msra.mxu0 0
        %1241 = vmatprep.subr.bf16.mxu0 0
        %1242 = vmatpush2.bf16.msra.mxu0 0
        %1243 = vmatprep.subr.bf16.mxu0 0
        %1244 = vmatpush2.bf16.msra.mxu0 0
        %1245 = vmatprep.subr.bf16.mxu0 0
        %1246 = vmatpush2.bf16.msra.mxu0 0
        %1247 = vmatprep.subr.bf16.mxu0 0
        %1248 = vmatpush2.bf16.msra.mxu0 0
        %1249 = vmatprep.subr.bf16.mxu0 0
        %1250 = vmatpush2.bf16.msra.mxu0 0
        %1251 = vmatprep.mubr.bf16.mxu0 0
        %1252 = vmatmul.mubr.bf16.gmra.mxu0 %v1218
        %v1253 = vpop.f32.mrf.mxu0
        %v1254 = vadd.f32 0.0, %v1253
        %v1255 = vpop.f32.mrf.mxu0
        %v1256 = vadd.f32 0.0, %v1255
        %v1257 = vpop.f32.mrf.mxu0
        %v1258 = vpop.f32.mrf.mxu0
        %1259 = vdwg.mxu0
        %v1260 = vadd.f32 %v1254, %v831
        %v1261 = vmax.f32 %v1260, 0.0
        %v1262 = vadd.f32 %v1256, %v858
        %s1263 = scalar_lea.vmem %s336, 40 [#allocation10]
        %1264 = vst [vmem:[%s1263] sm:$0xff] %v1262
        %v1265 = vpack.c.bf16 %v1261, %v1261
        %1266 = vmatprep.subr.bf16.mxu0 %v925
        %1267 = vmatpush1.bf16.msra.mxu0 %v924
        %1268 = vmatprep.subr.bf16.mxu0 %v923
        %1269 = vmatpush1.bf16.msra.mxu0 %v922
        %1270 = vmatprep.subr.bf16.mxu0 %v921
        %1271 = vmatpush1.bf16.msra.mxu0 %v920
        %1272 = vmatprep.subr.bf16.mxu0 %v919
        %1273 = vmatpush1.bf16.msra.mxu0 %v918
        %1274 = vmatprep.subr.bf16.mxu0 %v917
        %1275 = vmatpush1.bf16.msra.mxu0 %v916
        %1276 = vmatprep.subr.bf16.mxu0 %v915
        %1277 = vmatpush1.bf16.msra.mxu0 %v914
        %1278 = vmatprep.subr.bf16.mxu0 %v913
        %1279 = vmatpush1.bf16.msra.mxu0 %v912
        %1280 = vmatprep.subr.bf16.mxu0 %v911
        %1281 = vmatpush1.bf16.msra.mxu0 %v910
        %1282 = vmatprep.subr.bf16.mxu0 0
        %1283 = vmatpush2.bf16.msra.mxu0 0
        %1284 = vmatprep.subr.bf16.mxu0 0
        %1285 = vmatpush2.bf16.msra.mxu0 0
        %1286 = vmatprep.subr.bf16.mxu0 0
        %1287 = vmatpush2.bf16.msra.mxu0 0
        %1288 = vmatprep.subr.bf16.mxu0 0
        %1289 = vmatpush2.bf16.msra.mxu0 0
        %1290 = vmatprep.subr.bf16.mxu0 0
        %1291 = vmatpush2.bf16.msra.mxu0 0
        %1292 = vmatprep.subr.bf16.mxu0 0
        %1293 = vmatpush2.bf16.msra.mxu0 0
        %1294 = vmatprep.subr.bf16.mxu0 0
        %1295 = vmatpush2.bf16.msra.mxu0 0
        %1296 = vmatprep.subr.bf16.mxu0 0
        %1297 = vmatpush2.bf16.msra.mxu0 0
        %1298 = vmatprep.mubr.bf16.mxu0 0
        %1299 = vmatmul.mubr.bf16.gmra.mxu0 %v1265
        %v1300 = vpop.f32.mrf.mxu0
        %v1301 = vadd.f32 0.0, %v1300
        %v1302 = vpop.f32.mrf.mxu0
        %v1303 = vadd.f32 0.0, %v1302
        %v1304 = vpop.f32.mrf.mxu0
        %v1305 = vpop.f32.mrf.mxu0
        %1306 = vdwg.mxu0
        %v1307 = vadd.f32 %v1301, %v834
        %v1308 = vmax.f32 %v1307, 0.0
        %v1309 = vadd.f32 %v1303, %v858
        %s1310 = scalar_lea.vmem %s336, 48 [#allocation10]
        %1311 = vst [vmem:[%s1310] sm:$0xff] %v1309
        %v1312 = vpack.c.bf16 %v1308, %v1308
        %1313 = vmatprep.subr.bf16.mxu0 0
        %1314 = vmatpush1.bf16.msra.mxu0 %v925
        %1315 = vmatprep.subr.bf16.mxu0 0
        %1316 = vmatpush1.bf16.msra.mxu0 %v923
        %1317 = vmatprep.subr.bf16.mxu0 0
        %1318 = vmatpush1.bf16.msra.mxu0 %v921
        %1319 = vmatprep.subr.bf16.mxu0 0
        %1320 = vmatpush1.bf16.msra.mxu0 %v919
        %1321 = vmatprep.subr.bf16.mxu0 0
        %1322 = vmatpush1.bf16.msra.mxu0 %v917
        %1323 = vmatprep.subr.bf16.mxu0 0
        %1324 = vmatpush1.bf16.msra.mxu0 %v915
        %1325 = vmatprep.subr.bf16.mxu0 0
        %1326 = vmatpush1.bf16.msra.mxu0 %v913
        %1327 = vmatprep.subr.bf16.mxu0 0
        %1328 = vmatpush1.bf16.msra.mxu0 %v911
        %1329 = vmatprep.subr.bf16.mxu0 0
        %1330 = vmatpush2.bf16.msra.mxu0 0
        %1331 = vmatprep.subr.bf16.mxu0 0
        %1332 = vmatpush2.bf16.msra.mxu0 0
        %1333 = vmatprep.subr.bf16.mxu0 0
        %1334 = vmatpush2.bf16.msra.mxu0 0
        %1335 = vmatprep.subr.bf16.mxu0 0
        %1336 = vmatpush2.bf16.msra.mxu0 0
        %1337 = vmatprep.subr.bf16.mxu0 0
        %1338 = vmatpush2.bf16.msra.mxu0 0
        %1339 = vmatprep.subr.bf16.mxu0 0
        %1340 = vmatpush2.bf16.msra.mxu0 0
        %1341 = vmatprep.subr.bf16.mxu0 0
        %1342 = vmatpush2.bf16.msra.mxu0 0
        %1343 = vmatprep.subr.bf16.mxu0 0
        %1344 = vmatpush2.bf16.msra.mxu0 0
        %1345 = vmatprep.mubr.bf16.mxu0 0
        %1346 = vmatmul.mubr.bf16.gmra.mxu0 %v1312
        %v1347 = vpop.f32.mrf.mxu0
        %v1348 = vadd.f32 %v858, %v1347
        %v1349 = vpop.f32.mrf.mxu0
        %v1350 = vpop.f32.mrf.mxu0
        %v1351 = vpop.f32.mrf.mxu0
        %1352 = vdwg.mxu0
        %s1353 = scalar_lea.vmem %s336, 56 [#allocation10]
        %1354 = vst [vmem:[%s1353] sm:$0xff] %v1348
        %1355 = vst [vmem:[#allocation11] sm:$0xff] %v1308
        %s1356 = sand.u32 %s167, 1
        %s1357 = scalar_lea.sflag [#allocation4], %s1356
        %s1358 = sand.u32 %s167, 1
        %s1359 = smul.addr %s1358, 64
        %s1360 = scalar_lea.vmem [#allocation10], %s1359
        // Predicated region
        $region65: #{tpu_custom_call.1} parent=43 // pred_check
          %p1361 = pneg %p177
        $region66: #{tpu_custom_call.1} parent=43 // pred_check_branch
          %1363 = sbr.rel (%p1361) target = $region68
        $region67: #{tpu_custom_call.1} parent=43 // pred_region
          %s1364 = smul.u32 8, %s28
          %s1366 = ssub.s32 1024, 1024
          %1367 = vsyncadd %s1357, %s1366
          %s1368 = smul.addr %s1364, 128
          %s1369 = scalar_lea.hbm %s6, %s1368
          %s1370 = sshll.u32 %s1360, 4
          %s1371 = int_to_ptr.vmem [resolvable:$true] %s1370
          %1376 = dma.vmem_to_hbm [thread:$0]  %s1371, 1024, %s1369, %s1357, 128, 128, 8
        $region68: #{tpu_custom_call.1} parent=43 // pred_fallthru
          _
        // Predicated region
        $region69: #{tpu_custom_call.1} parent=43 // pred_check
          %p1377 = pneg %p198
        $region70: #{tpu_custom_call.1} parent=43 // pred_check_branch
          %1379 = sbr.rel (%p1377) target = $region72
        $region71: #{tpu_custom_call.1} parent=43 // pred_region
          %s1381 = ssub.s32 128, 128
          %1382 = vsyncadd [#allocation12], %s1381
          %s1384 = sshll.u32 [#allocation11], 4
          %s1385 = int_to_ptr.vmem [resolvable:$true] %s1384
          %1387 = dma.vmem_to_hbm [thread:$0]  %s1385, 128, %s7, [#allocation12]
        $region72: #{tpu_custom_call.1} parent=43 // pred_fallthru
          _
        // Predicated region
        $region73: #{tpu_custom_call.1} parent=43 // pred_check
          %p1388 = pneg %p198
        $region74: #{tpu_custom_call.1} parent=43 // pred_check_branch
          %1390 = sbr.rel (%p1388) target = $region76
        $region75: #{tpu_custom_call.1} parent=43 // pred_region
          %1391 = dma.done [#allocation12], 128
        $region76: #{tpu_custom_call.1} parent=43 // pred_fallthru
          _
      $region44: #{tpu_custom_call.1} parent=5 // pred_fallthru
        _
      %p1392 = scmp.le.s32.totalorder 2, %s23
      // Predicated region
      $region77: #{tpu_custom_call.1} parent=5 // pred_check
        %p1393 = pneg %p1392
      $region78: #{tpu_custom_call.1} parent=5 // pred_check_branch
        %1395 = sbr.rel (%p1393) target = $region80
      $region79: #{tpu_custom_call.1} parent=5 // pred_region
        %s1396 = ssub.s32 %s23, 2
        // Predicated region
        $region81: #{tpu_custom_call.1} parent=79 // pred_check
          %p1397 = pneg %p183
        $region82: #{tpu_custom_call.1} parent=79 // pred_check_branch
          %1399 = sbr.rel (%p1397) target = $region84
        $region83: #{tpu_custom_call.1} parent=79 // pred_region
          %s1400 = sand.u32 %s168, 1
          %s1401 = scalar_lea.sflag [#allocation4], %s1400
          %s1402 = sand.u32 %s168, 1
          %s1403 = smul.addr %s1402, 64
          %s1404 = scalar_lea.vmem [#allocation10], %s1403
          %1405 = dma.done %s1401, 1024
        $region84: #{tpu_custom_call.1} parent=79 // pred_fallthru
          _
      $region80: #{tpu_custom_call.1} parent=5 // pred_fallthru
        _
    $region6: #{tpu_custom_call.1} parent=1 // loop_footer
      %s27 = sadd.s32 1, %s23
    $region7: #{tpu_custom_call.1} parent=1 // loop_footer_branch
      %22 = sbr.rel target = $region3
    $region8: #{tpu_custom_call.1} parent=1 // loop_exit
      _
    %1406 = vsyncpa [#allocation3], 1
    %s1407 = scalar_lea.sflag [#allocation3], 1
    %1408 = vsyncpa %s1407, 1
    %1409 = vsyncpa [#allocation6], 1
    %1410 = vsyncpa [#allocation9], 1
    %1411 = vsyncpa [#allocation4], 1
    %s1412 = scalar_lea.sflag [#allocation4], 1
    %1413 = vsyncpa %s1412, 1
    %1414 = vsyncpa [#allocation12], 1

</llo_original>
